<compile_context>
chip_gen: v7x
topology: tpu7x:2x2x1
jax: 0.10.0
libtpu: 0.0.40
codegen_flags: <defaults>
</compile_context>

<pallas_src>
import functools

import jax
import jax.numpy as jnp
from jax.experimental import pallas as pl
from jax.experimental.pallas import tpu as pltpu

LANE = 128
SUBLANE = 8


def _round_up(x, m):
    return (x + m - 1) // m * m


# --------------------------------------------------------------------------
# Kernel
# --------------------------------------------------------------------------
def _vae_kernel(batch, eps, apply_dmask, apply_lmask,
                x_ref, noise_ref, dmask_ref, lmask_ref, *refs):
    # refs layout: 20 parameter refs (encoder: 4x(w,b) trunk + fused head (w,b);
    # decoder: 5x(w,b)), followed by 6 output refs.
    params = refs[:20]
    mu_ref, scale_ref, z_ref, recon_ref, lrec_ref, lkl_ref = refs[20:]

    enc = params[:10]
    dec = params[10:]

    x = x_ref[...]                              # (TB, Dp) f32, padded lanes = 0
    noise = noise_ref[...]                      # (TB, Lp) f32, padded lanes = 0
    tb = x.shape[0]
    lp = noise.shape[1]                         # padded latent width (multiple of 128)

    def linear(h, w_ref, b_ref):
        w = w_ref[...]
        # Activations cast to the weight dtype (bf16 path on v6e/v7x); MXU
        # accumulation and the bias add stay f32.
        return (jnp.dot(h.astype(w.dtype), w, preferred_element_type=jnp.float32)
                + b_ref[...])

    # ---------------- encoder trunk: 4 x (Linear + SiLU) ----------------
    h = x
    for i in range(4):
        h = linear(h, enc[2 * i], enc[2 * i + 1])
        h = h * jax.nn.sigmoid(h)               # SiLU; zero-padded lanes stay 0

    # ---------------- fused head: one (H4, 2*Lp) matmul, 128-aligned split ----
    head = linear(h, enc[8], enc[9])            # lanes [0:Lp]=mu, [Lp:2Lp]=logvar
    mu = head[:, :lp]
    logvar = head[:, lp:]
    scale = jax.nn.softplus(logvar) + eps       # diag of scale_tril

    # ---------------- reparameterize (rsample) ----------------
    z = mu + scale * noise                      # padded latent lanes stay 0

    # ---------------- decoder: 4 x (Linear + SiLU) + Linear ----------------
    d = z
    for i in range(4):
        d = linear(d, dec[2 * i], dec[2 * i + 1])
        d = d * jax.nn.sigmoid(d)
    d = linear(d, dec[8], dec[9])               # (TB, Dp) logits

    # ---------------- sigmoid + BCE (reduction='none').sum(-1) ----------------
    # log(sigmoid(d)) = -softplus(-d); recon = exp(log_sigmoid) reuses that
    # result (saves one transcendental pass over the widest tensor).
    # log(1 - sigmoid(d)) = log(sigmoid(d)) - d; PyTorch clamps logs at -100.
    log_r_raw = -jax.nn.softplus(-d)
    recon = jnp.exp(log_r_raw)                  # == sigmoid(d)
    log_r = jnp.maximum(log_r_raw, -100.0)
    log_1mr = jnp.maximum(log_r_raw - d, -100.0)
    bce = -(x * log_r + (1.0 - x) * log_1mr)    # (TB, Dp)
    if apply_dmask:                             # mask padded input lanes (static skip)
        bce = bce * dmask_ref[...]
    bce_row = jnp.sum(bce, axis=1, keepdims=True)            # (TB, 1)

    # ---------------- KL( N(mu, diag(scale^2)) || N(0, I) ) ----------------
    kl_elem = 0.5 * (scale * scale + mu * mu - 1.0 - 2.0 * jnp.log(scale))
    if apply_lmask:                             # mask padded latent lanes (static skip)
        kl_elem = kl_elem * lmask_ref[...]
    kl_row = jnp.sum(kl_elem, axis=1, keepdims=True)          # (TB, 1)

    # ---------------- mask padded batch rows; per-tile partial sums ----------
    row = (jax.lax.broadcasted_iota(jnp.int32, (tb, 1), 0)
           + pl.program_id(0) * tb)
    row_mask = (row < batch).astype(jnp.float32)
    lrec_part = jnp.sum(bce_row * row_mask, axis=0, keepdims=True)   # (1, 1)
    lkl_part = jnp.sum(kl_row * row_mask, axis=0, keepdims=True)     # (1, 1)
    # Partials broadcast into full (8,128)-aligned blocks -> no masked partial
    # stores; the wrapper reads element [0,0] per tile and finishes the mean.
    lrec_ref[...] = jnp.broadcast_to(lrec_part, (SUBLANE, LANE))
    lkl_ref[...] = jnp.broadcast_to(lkl_part, (SUBLANE, LANE))

    mu_ref[...] = mu
    scale_ref[...] = scale
    z_ref[...] = z
    recon_ref[...] = recon.astype(recon_ref.dtype)


# --------------------------------------------------------------------------
# Parameter construction / padding
# --------------------------------------------------------------------------
def init_vae_params(key, input_dim, hidden_dim, latent_dim):
    """PyTorch-style init (uniform +-1/sqrt(fan_in)) with the module's shapes.

    Weights are stored as (in, out) so the kernel computes x @ W + b; biases
    are (1, out).  The final encoder layer outputs [mu | logvar] concatenated
    (2*latent), exactly like the torch module."""
    enc_dims = [input_dim, hidden_dim, hidden_dim // 2, hidden_dim // 4,
                hidden_dim // 8, 2 * latent_dim]
    dec_dims = [latent_dim, hidden_dim // 8, hidden_dim // 4, hidden_dim // 2,
                hidden_dim, input_dim]

    params = []
    for dims in (enc_dims, dec_dims):
        for fan_in, fan_out in zip(dims[:-1], dims[1:]):
            key, kw, kb = jax.random.split(key, 3)
            bound = 1.0 / float(fan_in) ** 0.5
            w = jax.random.uniform(kw, (fan_in, fan_out), jnp.float32,
                                   minval=-bound, maxval=bound)
            b = jax.random.uniform(kb, (1, fan_out), jnp.float32,
                                   minval=-bound, maxval=bound)
            params.append(w)
            params.append(b)
    return params  # 20 arrays: 10 encoder (w,b) + 10 decoder (w,b)


def _pad2(a, rows, cols):
    out = jnp.zeros((rows, cols), a.dtype)
    return out.at[:a.shape[0], :a.shape[1]].set(a)


def prepare_kernel_params(params, input_dim, hidden_dim, latent_dim,
                          lane=LANE, matmul_dtype=jnp.float32):
    """Zero-pads every feature dim to the 128-lane granule and builds a fused
    mu/logvar head whose output lanes [0:Lp] hold mu and [Lp:2Lp] hold logvar
    (so the in-kernel split is a static 128-aligned lane slice).  Weights are
    stored in `matmul_dtype` (bf16 on v6e/v7x halves weight VMEM + MXU feed);
    biases stay f32 since they are added after the f32-accumulated dot."""
    ru = lambda v: _round_up(v, lane)
    h1, h2, h3, h4 = hidden_dim, hidden_dim // 2, hidden_dim // 4, hidden_dim // 8
    Dp, H1, H2, H3, H4 = ru(input_dim), ru(h1), ru(h2), ru(h3), ru(h4)
    Lp = ru(latent_dim)

    enc = params[:10]
    dec = params[10:]

    kp = []
    enc_in_pads = [Dp, H1, H2, H3]
    enc_out_pads = [H1, H2, H3, H4]
    for i in range(4):
        kp.append(_pad2(enc[2 * i], enc_in_pads[i], enc_out_pads[i]).astype(matmul_dtype))
        kp.append(_pad2(enc[2 * i + 1], 1, enc_out_pads[i]))
    # Fused head: torch.chunk order -> mu = first latent cols, logvar = last.
    w5, b5 = enc[8], enc[9]
    w_head = jnp.zeros((H4, 2 * Lp), jnp.float32)
    w_head = w_head.at[:w5.shape[0], :latent_dim].set(w5[:, :latent_dim])
    w_head = w_head.at[:w5.shape[0], Lp:Lp + latent_dim].set(w5[:, latent_dim:])
    b_head = jnp.zeros((1, 2 * Lp), jnp.float32)
    b_head = b_head.at[:, :latent_dim].set(b5[:, :latent_dim])
    b_head = b_head.at[:, Lp:Lp + latent_dim].set(b5[:, latent_dim:])
    kp.append(w_head.astype(matmul_dtype))
    kp.append(b_head)

    dec_in_pads = [Lp, H4, H3, H2, H1]
    dec_out_pads = [H4, H3, H2, H1, Dp]
    for i in range(5):
        kp.append(_pad2(dec[2 * i], dec_in_pads[i], dec_out_pads[i]).astype(matmul_dtype))
        kp.append(_pad2(dec[2 * i + 1], 1, dec_out_pads[i]))
    return kp  # 20 padded arrays


# --------------------------------------------------------------------------
# VMEM budgeting (generation-aware)
# --------------------------------------------------------------------------
def _vmem_limit_bytes():
    """~75% of physical VMEM: v7x 64 MiB -> 48 MiB, v5e/v6e 128 MiB -> 96 MiB."""
    default = 48 * 1024 * 1024          # safe on every generation
    try:
        info = pltpu.get_tpu_info()
        for attr in ("vmem_capacity_bytes", "vmem_size_bytes", "vmem_bytes"):
            cap = getattr(info, attr, None)
            if cap:
                return int(min(0.75 * cap, 96 * 1024 * 1024))
    except Exception:
        pass
    return default


def _choose_batch_tile(batch, d_pad, l_pad, h1_pad, param_bytes,
                       vmem_limit, max_batch_tile):
    tb = min(max_batch_tile, _round_up(batch, SUBLANE))
    tb = max(SUBLANE, _round_up(tb, SUBLANE))

    def tile_bytes(t):
        # Double-buffered pipelined blocks: x + recon (d_pad wide),
        # noise + mu + scale + z (l_pad wide), two (8,128) loss-partial blocks.
        io = 2 * 4 * (t * d_pad * 2 + t * l_pad * 4 + 2 * SUBLANE * LANE)
        # Rough bound for live f32 temporaries inside the body.
        live = 4 * t * (2 * d_pad + h1_pad + 2 * l_pad)
        return io + live

    budget = vmem_limit - 2 * param_bytes - (4 << 20)   # dbl-buffered params + slack
    if budget < tile_bytes(SUBLANE):
        # TODO(synk): fall back to a K-tiled ("arbitrary") second grid axis that
        # streams the first-encoder / last-decoder weight matrices when the
        # weights alone overflow VMEM (big models on v7x / v5e-scoped defaults).
        raise NotImplementedError(
            f"padded VAE weights ({2 * param_bytes / 2**20:.1f} MiB double-buffered)"
            f" do not fit the {vmem_limit / 2**20:.1f} MiB VMEM budget; K-tiled"
            " weight streaming is not implemented")
    while tb > SUBLANE and tile_bytes(tb) > budget:
        tb = max(SUBLANE, _round_up(tb // 2, SUBLANE))
    return tb


# --------------------------------------------------------------------------
# Wrapper
# --------------------------------------------------------------------------
def vae_forward(x_nchw, noise, params, hidden_dim, latent_dim, image_size,
                eps=1e-8, max_batch_tile=512, matmul_dtype=jnp.float32):
    """Full VAE forward pass (with losses) as a batch-tiled Pallas kernel.

    max_batch_tile: batch rows per grid step (multiple of 8).  512 is the
    default per the HBM-roofline sweep (~85% of roofline vs ~60% at 256); the
    VMEM guard shrinks it automatically when the budget is tight.
    matmul_dtype: jnp.bfloat16 on v6e/v7x streams weights/activations at native
    MXU rate with f32 accumulation; default f32 matches the PyTorch module.
    """
    batch = x_nchw.shape[0]
    x_flat = x_nchw.reshape(batch, -1).astype(jnp.float32)   # torch x.view(B, -1)
    input_dim = x_flat.shape[1]

    d_pad = _round_up(input_dim, LANE)
    l_pad = _round_up(latent_dim, LANE)
    h1_pad = _round_up(hidden_dim, LANE)

    kparams = prepare_kernel_params(params, input_dim, hidden_dim, latent_dim,
                                    matmul_dtype=matmul_dtype)
    param_bytes = int(sum(int(p.size) * p.dtype.itemsize for p in kparams))

    vmem_limit = _vmem_limit_bytes()
    tb = _choose_batch_tile(batch, d_pad, l_pad, h1_pad, param_bytes,
                            vmem_limit, max_batch_tile)
    b_pad = _round_up(batch, tb)
    num_tiles = b_pad // tb

    # Skip the zero-pad copies when shapes already align (saves full HBM passes).
    if b_pad == batch and d_pad == input_dim:
        x_p = x_flat
    else:
        x_p = jnp.zeros((b_pad, d_pad), jnp.float32).at[:batch, :input_dim].set(x_flat)
    noise_f = noise.astype(jnp.float32)
    if b_pad == batch and l_pad == latent_dim:
        noise_p = noise_f
    else:
        noise_p = jnp.zeros((b_pad, l_pad), jnp.float32).at[:batch, :latent_dim].set(noise_f)

    # Grid-invariant lane masks for the losses (applied only if padding exists).
    apply_dmask = d_pad != input_dim
    apply_lmask = l_pad != latent_dim
    dmask = (jnp.arange(d_pad) < input_dim).astype(jnp.float32).reshape(1, d_pad)
    lmask = (jnp.arange(l_pad) < latent_dim).astype(jnp.float32).reshape(1, l_pad)

    kernel = functools.partial(_vae_kernel, batch, eps, apply_dmask, apply_lmask)

    row_spec_x = pl.BlockSpec((tb, d_pad), lambda i: (i, 0))
    row_spec_l = pl.BlockSpec((tb, l_pad), lambda i: (i, 0))
    part_spec = pl.BlockSpec((SUBLANE, LANE), lambda i: (i, 0))
    dmask_spec = pl.BlockSpec((1, d_pad), lambda i: (0, 0))
    lmask_spec = pl.BlockSpec((1, l_pad), lambda i: (0, 0))
    # Weights / biases stay VMEM-resident across the grid (constant block index).
    param_specs = [pl.BlockSpec(p.shape, lambda i: (0, 0)) for p in kparams]

    out_shapes = (
        jax.ShapeDtypeStruct((b_pad, l_pad), jnp.float32),          # mu (padded)
        jax.ShapeDtypeStruct((b_pad, l_pad), jnp.float32),          # scale (padded)
        jax.ShapeDtypeStruct((b_pad, l_pad), jnp.float32),          # z (padded)
        jax.ShapeDtypeStruct((b_pad, d_pad), jnp.float32),          # recon (flat, padded)
        jax.ShapeDtypeStruct((num_tiles * SUBLANE, LANE), jnp.float32),  # bce partials
        jax.ShapeDtypeStruct((num_tiles * SUBLANE, LANE), jnp.float32),  # kl partials
    )
    out_specs = (row_spec_l, row_spec_l, row_spec_l, row_spec_x,
                 part_spec, part_spec)

    mu_p, scale_p, z_p, recon_p, lrec_parts, lkl_parts = pl.pallas_call(
        kernel,
        grid=(num_tiles,),
        out_shape=out_shapes,
        in_specs=[row_spec_x, row_spec_l, dmask_spec, lmask_spec] + param_specs,
        out_specs=out_specs,
        compiler_params=pltpu.CompilerParams(
            dimension_semantics=("parallel",),
            vmem_limit_bytes=vmem_limit),
    )(x_p, noise_p, dmask, lmask, *kparams)

    # Finish the reductions in JAX: sum of per-tile partials / batch, then add.
    lrec_rows = lrec_parts.reshape(num_tiles, SUBLANE, LANE)[:, 0, 0]
    lkl_rows = lkl_parts.reshape(num_tiles, SUBLANE, LANE)[:, 0, 0]
    loss_recon = jnp.sum(lrec_rows) / batch
    loss_kl = jnp.sum(lkl_rows) / batch
    loss = loss_recon + loss_kl

    # Slice away padding only if any was added (no gratuitous HBM copies).
    if b_pad == batch and d_pad == input_dim:
        recon_flat = recon_p
    else:
        recon_flat = recon_p[:batch, :input_dim]
    x_recon = recon_flat.reshape(batch, 3, *image_size)
    if b_pad == batch and l_pad == latent_dim:
        mu_o, scale_o, z_o = mu_p, scale_p, z_p
    else:
        mu_o = mu_p[:batch, :latent_dim]
        scale_o = scale_p[:batch, :latent_dim]
        z_o = z_p[:batch, :latent_dim]

    return {
        # TODO(synk): torch.distributions.MultivariateNormal has no Pallas
        # equivalent; (mu, scale) fully parameterize the diagonal Gaussian.
        "z_dist_mu": mu_o,
        "z_dist_scale": scale_o,
        "z_sample": z_o,
        "x_recon": x_recon,
        "loss": loss,
        "loss_recon": loss_recon,
        "loss_kl": loss_kl,
    }


if __name__ == "__main__":
    # Small shapes consistent with the module: x is (B, 3, H, W).
    batch = 2
    image_size = (16, 16)
    input_dim = 3 * image_size[0] * image_size[1]   # 768
    hidden_dim = 32
    latent_dim = 4

    key = jax.random.PRNGKey(0)
    k_params, k_x, k_noise = jax.random.split(key, 3)

    params = init_vae_params(k_params, input_dim, hidden_dim, latent_dim)
    # BCE targets must lie in [0, 1] (as the PyTorch module assumes).
    x = jax.random.uniform(k_x, (batch, 3, *image_size), jnp.float32)
    # Reparameterization noise (rsample's standard-normal draw), done in JAX.
    noise = jax.random.normal(k_noise, (batch, latent_dim), jnp.float32)

    out = vae_forward(x, noise, params, hidden_dim, latent_dim, image_size)
    jax.block_until_ready(out)

    # Basic sanity checks on shapes / finiteness.
    assert out["x_recon"].shape == (batch, 3, *image_size)
    assert out["z_sample"].shape == (batch, latent_dim)
    assert out["z_dist_mu"].shape == (batch, latent_dim)
    assert out["z_dist_scale"].shape == (batch, latent_dim)
    assert bool(jnp.all(out["x_recon"] > 0.0)) and bool(jnp.all(out["x_recon"] < 1.0))
    assert bool(jnp.isfinite(out["loss"]))
    assert bool(jnp.isfinite(out["loss_recon"]))
    assert bool(jnp.isfinite(out["loss_kl"]))

    print("KERNEL_OK")
</pallas_src>

<mosaic_0001>
module attributes {stable_mosaic.version = 11 : i64} {
  func.func @_vae_kernel(%arg0: i32, %arg1: memref<8x768xf32, #tpu.memory_space<vmem>>, %arg2: memref<8x128xf32, #tpu.memory_space<vmem>>, %arg3: memref<1x768xf32, #tpu.memory_space<vmem>>, %arg4: memref<1x128xf32, #tpu.memory_space<vmem>>, %arg5: memref<768x128xf32, #tpu.memory_space<vmem>>, %arg6: memref<1x128xf32, #tpu.memory_space<vmem>>, %arg7: memref<128x128xf32, #tpu.memory_space<vmem>>, %arg8: memref<1x128xf32, #tpu.memory_space<vmem>>, %arg9: memref<128x128xf32, #tpu.memory_space<vmem>>, %arg10: memref<1x128xf32, #tpu.memory_space<vmem>>, %arg11: memref<128x128xf32, #tpu.memory_space<vmem>>, %arg12: memref<1x128xf32, #tpu.memory_space<vmem>>, %arg13: memref<128x256xf32, #tpu.memory_space<vmem>>, %arg14: memref<1x256xf32, #tpu.memory_space<vmem>>, %arg15: memref<128x128xf32, #tpu.memory_space<vmem>>, %arg16: memref<1x128xf32, #tpu.memory_space<vmem>>, %arg17: memref<128x128xf32, #tpu.memory_space<vmem>>, %arg18: memref<1x128xf32, #tpu.memory_space<vmem>>, %arg19: memref<128x128xf32, #tpu.memory_space<vmem>>, %arg20: memref<1x128xf32, #tpu.memory_space<vmem>>, %arg21: memref<128x128xf32, #tpu.memory_space<vmem>>, %arg22: memref<1x128xf32, #tpu.memory_space<vmem>>, %arg23: memref<128x768xf32, #tpu.memory_space<vmem>>, %arg24: memref<1x768xf32, #tpu.memory_space<vmem>>, %arg25: memref<8x128xf32, #tpu.memory_space<vmem>>, %arg26: memref<8x128xf32, #tpu.memory_space<vmem>>, %arg27: memref<8x128xf32, #tpu.memory_space<vmem>>, %arg28: memref<8x768xf32, #tpu.memory_space<vmem>>, %arg29: memref<8x128xf32, #tpu.memory_space<vmem>>, %arg30: memref<8x128xf32, #tpu.memory_space<vmem>>) attributes {dimension_semantics = [#tpu.dimension_semantics<parallel>], iteration_bounds = array<i64: 1>, scalar_prefetch = 0 : i64, scratch_operands = 0 : i64, tpu.core_type = #tpu.core_type<tc>, window_params = [{transform_indices = @transform_0, window_bounds = array<i64: 8, 768>}, {transform_indices = @transform_1, window_bounds = array<i64: 8, 128>}, {pipeline_mode = #tpu.pipeline_mode<synchronous>, transform_indices = @transform_2, window_bounds = array<i64: 1, 768>}, {pipeline_mode = #tpu.pipeline_mode<synchronous>, transform_indices = @transform_3, window_bounds = array<i64: 1, 128>}, {pipeline_mode = #tpu.pipeline_mode<synchronous>, transform_indices = @transform_4, window_bounds = array<i64: 768, 128>}, {pipeline_mode = #tpu.pipeline_mode<synchronous>, transform_indices = @transform_5, window_bounds = array<i64: 1, 128>}, {pipeline_mode = #tpu.pipeline_mode<synchronous>, transform_indices = @transform_6, window_bounds = array<i64: 128, 128>}, {pipeline_mode = #tpu.pipeline_mode<synchronous>, transform_indices = @transform_7, window_bounds = array<i64: 1, 128>}, {pipeline_mode = #tpu.pipeline_mode<synchronous>, transform_indices = @transform_8, window_bounds = array<i64: 128, 128>}, {pipeline_mode = #tpu.pipeline_mode<synchronous>, transform_indices = @transform_9, window_bounds = array<i64: 1, 128>}, {pipeline_mode = #tpu.pipeline_mode<synchronous>, transform_indices = @transform_10, window_bounds = array<i64: 128, 128>}, {pipeline_mode = #tpu.pipeline_mode<synchronous>, transform_indices = @transform_11, window_bounds = array<i64: 1, 128>}, {pipeline_mode = #tpu.pipeline_mode<synchronous>, transform_indices = @transform_12, window_bounds = array<i64: 128, 256>}, {pipeline_mode = #tpu.pipeline_mode<synchronous>, transform_indices = @transform_13, window_bounds = array<i64: 1, 256>}, {pipeline_mode = #tpu.pipeline_mode<synchronous>, transform_indices = @transform_14, window_bounds = array<i64: 128, 128>}, {pipeline_mode = #tpu.pipeline_mode<synchronous>, transform_indices = @transform_15, window_bounds = array<i64: 1, 128>}, {pipeline_mode = #tpu.pipeline_mode<synchronous>, transform_indices = @transform_16, window_bounds = array<i64: 128, 128>}, {pipeline_mode = #tpu.pipeline_mode<synchronous>, transform_indices = @transform_17, window_bounds = array<i64: 1, 128>}, {pipeline_mode = #tpu.pipeline_mode<synchronous>, transform_indices = @transform_18, window_bounds = array<i64: 128, 128>}, {pipeline_mode = #tpu.pipeline_mode<synchronous>, transform_indices = @transform_19, window_bounds = array<i64: 1, 128>}, {pipeline_mode = #tpu.pipeline_mode<synchronous>, transform_indices = @transform_20, window_bounds = array<i64: 128, 128>}, {pipeline_mode = #tpu.pipeline_mode<synchronous>, transform_indices = @transform_21, window_bounds = array<i64: 1, 128>}, {pipeline_mode = #tpu.pipeline_mode<synchronous>, transform_indices = @transform_22, window_bounds = array<i64: 128, 768>}, {pipeline_mode = #tpu.pipeline_mode<synchronous>, transform_indices = @transform_23, window_bounds = array<i64: 1, 768>}, {transform_indices = @transform_24, window_bounds = array<i64: 8, 128>}, {transform_indices = @transform_25, window_bounds = array<i64: 8, 128>}, {transform_indices = @transform_26, window_bounds = array<i64: 8, 128>}, {transform_indices = @transform_27, window_bounds = array<i64: 8, 768>}, {transform_indices = @transform_28, window_bounds = array<i64: 8, 128>}, {transform_indices = @transform_29, window_bounds = array<i64: 8, 128>}]} {
    %c0 = arith.constant 0 : index
    %c0_0 = arith.constant 0 : index
    %0 = vector.load %arg1[%c0, %c0_0] : memref<8x768xf32, #tpu.memory_space<vmem>>, vector<8x768xf32>
    %c0_1 = arith.constant 0 : index
    %c0_2 = arith.constant 0 : index
    %1 = vector.load %arg2[%c0_1, %c0_2] : memref<8x128xf32, #tpu.memory_space<vmem>>, vector<8x128xf32>
    %c0_3 = arith.constant 0 : index
    %c0_4 = arith.constant 0 : index
    %2 = vector.load %arg5[%c0_3, %c0_4] : memref<768x128xf32, #tpu.memory_space<vmem>>, vector<768x128xf32>
    %cst = arith.constant dense<0.000000e+00> : vector<8x128xf32>
    %3 = tpu.matmul %0, %2, %cst {dimension_numbers = #tpu.dot_dimension_numbers<[1], [0], [0], [1], [0, 0, 1, 1], [], []>} : vector<8x768xf32>, vector<768x128xf32>, vector<8x128xf32> -> vector<8x128xf32>
    %c0_5 = arith.constant 0 : index
    %c0_6 = arith.constant 0 : index
    %4 = vector.load %arg6[%c0_5, %c0_6] : memref<1x128xf32, #tpu.memory_space<vmem>>, vector<1x128xf32>
    %5 = vector.broadcast %4 : vector<1x128xf32> to vector<8x128xf32>
    %6 = arith.addf %3, %5 : vector<8x128xf32>
    %7 = arith.negf %6 : vector<8x128xf32>
    %8 = math.exp %7 : vector<8x128xf32>
    %cst_7 = arith.constant 1.000000e+00 : f32
    %9 = vector.broadcast %cst_7 : f32 to vector<8x128xf32>
    %10 = arith.addf %9, %8 : vector<8x128xf32>
    %11 = arith.divf %9, %10 : vector<8x128xf32>
    %12 = arith.mulf %6, %11 : vector<8x128xf32>
    %c0_8 = arith.constant 0 : index
    %c0_9 = arith.constant 0 : index
    %13 = vector.load %arg7[%c0_8, %c0_9] : memref<128x128xf32, #tpu.memory_space<vmem>>, vector<128x128xf32>
    %cst_10 = arith.constant dense<0.000000e+00> : vector<8x128xf32>
    %14 = tpu.matmul %12, %13, %cst_10 {dimension_numbers = #tpu.dot_dimension_numbers<[1], [0], [0], [1], [0, 0, 1, 1], [], []>} : vector<8x128xf32>, vector<128x128xf32>, vector<8x128xf32> -> vector<8x128xf32>
    %c0_11 = arith.constant 0 : index
    %c0_12 = arith.constant 0 : index
    %15 = vector.load %arg8[%c0_11, %c0_12] : memref<1x128xf32, #tpu.memory_space<vmem>>, vector<1x128xf32>
    %16 = vector.broadcast %15 : vector<1x128xf32> to vector<8x128xf32>
    %17 = arith.addf %14, %16 : vector<8x128xf32>
    %18 = arith.negf %17 : vector<8x128xf32>
    %19 = math.exp %18 : vector<8x128xf32>
    %cst_13 = arith.constant 1.000000e+00 : f32
    %20 = vector.broadcast %cst_13 : f32 to vector<8x128xf32>
    %21 = arith.addf %20, %19 : vector<8x128xf32>
    %22 = arith.divf %20, %21 : vector<8x128xf32>
    %23 = arith.mulf %17, %22 : vector<8x128xf32>
    %c0_14 = arith.constant 0 : index
    %c0_15 = arith.constant 0 : index
    %24 = vector.load %arg9[%c0_14, %c0_15] : memref<128x128xf32, #tpu.memory_space<vmem>>, vector<128x128xf32>
    %cst_16 = arith.constant dense<0.000000e+00> : vector<8x128xf32>
    %25 = tpu.matmul %23, %24, %cst_16 {dimension_numbers = #tpu.dot_dimension_numbers<[1], [0], [0], [1], [0, 0, 1, 1], [], []>} : vector<8x128xf32>, vector<128x128xf32>, vector<8x128xf32> -> vector<8x128xf32>
    %c0_17 = arith.constant 0 : index
    %c0_18 = arith.constant 0 : index
    %26 = vector.load %arg10[%c0_17, %c0_18] : memref<1x128xf32, #tpu.memory_space<vmem>>, vector<1x128xf32>
    %27 = vector.broadcast %26 : vector<1x128xf32> to vector<8x128xf32>
    %28 = arith.addf %25, %27 : vector<8x128xf32>
    %29 = arith.negf %28 : vector<8x128xf32>
    %30 = math.exp %29 : vector<8x128xf32>
    %cst_19 = arith.constant 1.000000e+00 : f32
    %31 = vector.broadcast %cst_19 : f32 to vector<8x128xf32>
    %32 = arith.addf %31, %30 : vector<8x128xf32>
    %33 = arith.divf %31, %32 : vector<8x128xf32>
    %34 = arith.mulf %28, %33 : vector<8x128xf32>
    %c0_20 = arith.constant 0 : index
    %c0_21 = arith.constant 0 : index
    %35 = vector.load %arg11[%c0_20, %c0_21] : memref<128x128xf32, #tpu.memory_space<vmem>>, vector<128x128xf32>
    %cst_22 = arith.constant dense<0.000000e+00> : vector<8x128xf32>
    %36 = tpu.matmul %34, %35, %cst_22 {dimension_numbers = #tpu.dot_dimension_numbers<[1], [0], [0], [1], [0, 0, 1, 1], [], []>} : vector<8x128xf32>, vector<128x128xf32>, vector<8x128xf32> -> vector<8x128xf32>
    %c0_23 = arith.constant 0 : index
    %c0_24 = arith.constant 0 : index
    %37 = vector.load %arg12[%c0_23, %c0_24] : memref<1x128xf32, #tpu.memory_space<vmem>>, vector<1x128xf32>
    %38 = vector.broadcast %37 : vector<1x128xf32> to vector<8x128xf32>
    %39 = arith.addf %36, %38 : vector<8x128xf32>
    %40 = arith.negf %39 : vector<8x128xf32>
    %41 = math.exp %40 : vector<8x128xf32>
    %cst_25 = arith.constant 1.000000e+00 : f32
    %42 = vector.broadcast %cst_25 : f32 to vector<8x128xf32>
    %43 = arith.addf %42, %41 : vector<8x128xf32>
    %44 = arith.divf %42, %43 : vector<8x128xf32>
    %45 = arith.mulf %39, %44 : vector<8x128xf32>
    %c0_26 = arith.constant 0 : index
    %c0_27 = arith.constant 0 : index
    %46 = vector.load %arg13[%c0_26, %c0_27] : memref<128x256xf32, #tpu.memory_space<vmem>>, vector<128x256xf32>
    %cst_28 = arith.constant dense<0.000000e+00> : vector<8x256xf32>
    %47 = tpu.matmul %45, %46, %cst_28 {dimension_numbers = #tpu.dot_dimension_numbers<[1], [0], [0], [1], [0, 0, 1, 1], [], []>} : vector<8x128xf32>, vector<128x256xf32>, vector<8x256xf32> -> vector<8x256xf32>
    %c0_29 = arith.constant 0 : index
    %c0_30 = arith.constant 0 : index
    %48 = vector.load %arg14[%c0_29, %c0_30] : memref<1x256xf32, #tpu.memory_space<vmem>>, vector<1x256xf32>
    %49 = vector.broadcast %48 : vector<1x256xf32> to vector<8x256xf32>
    %50 = arith.addf %47, %49 : vector<8x256xf32>
    %51 = vector.extract_strided_slice %50 {offsets = [0, 0], sizes = [8, 128], strides = [1, 1]} : vector<8x256xf32> to vector<8x128xf32>
    %52 = vector.extract_strided_slice %50 {offsets = [0, 128], sizes = [8, 128], strides = [1, 1]} : vector<8x256xf32> to vector<8x128xf32>
    %cst_31 = arith.constant 0.000000e+00 : f32
    %53 = vector.broadcast %cst_31 : f32 to vector<8x128xf32>
    %54 = arith.maximumf %52, %53 : vector<8x128xf32>
    %55 = vector.broadcast %cst_31 : f32 to vector<8x128xf32>
    %56 = arith.subf %52, %55 : vector<8x128xf32>
    %57 = arith.cmpf one, %56, %56 : vector<8x128xf32>
    %58 = vector.broadcast %cst_31 : f32 to vector<8x128xf32>
    %59 = arith.addf %52, %58 : vector<8x128xf32>
    %60 = math.absf %56 : vector<8x128xf32>
    %cst_32 = arith.constant 0.000000e+00 : f32
    %61 = vector.broadcast %cst_32 : f32 to vector<8x128xf32>
    %62 = arith.subf %61, %60 : vector<8x128xf32>
    %63 = math.exp %62 : vector<8x128xf32>
    %64 = math.log1p %63 : vector<8x128xf32>
    %65 = arith.addf %54, %64 : vector<8x128xf32>
    %66 = arith.select %57, %59, %65 : vector<8x128xi1>, vector<8x128xf32>
    %cst_33 = arith.constant 9.99999993E-9 : f32
    %67 = vector.broadcast %cst_33 : f32 to vector<8x128xf32>
    %68 = arith.addf %66, %67 : vector<8x128xf32>
    %69 = arith.mulf %68, %1 : vector<8x128xf32>
    %70 = arith.addf %51, %69 : vector<8x128xf32>
    %c0_34 = arith.constant 0 : index
    %c0_35 = arith.constant 0 : index
    %71 = vector.load %arg15[%c0_34, %c0_35] : memref<128x128xf32, #tpu.memory_space<vmem>>, vector<128x128xf32>
    %cst_36 = arith.constant dense<0.000000e+00> : vector<8x128xf32>
    %72 = tpu.matmul %70, %71, %cst_36 {dimension_numbers = #tpu.dot_dimension_numbers<[1], [0], [0], [1], [0, 0, 1, 1], [], []>} : vector<8x128xf32>, vector<128x128xf32>, vector<8x128xf32> -> vector<8x128xf32>
    %c0_37 = arith.constant 0 : index
    %c0_38 = arith.constant 0 : index
    %73 = vector.load %arg16[%c0_37, %c0_38] : memref<1x128xf32, #tpu.memory_space<vmem>>, vector<1x128xf32>
    %74 = vector.broadcast %73 : vector<1x128xf32> to vector<8x128xf32>
    %75 = arith.addf %72, %74 : vector<8x128xf32>
    %76 = arith.negf %75 : vector<8x128xf32>
    %77 = math.exp %76 : vector<8x128xf32>
    %cst_39 = arith.constant 1.000000e+00 : f32
    %78 = vector.broadcast %cst_39 : f32 to vector<8x128xf32>
    %79 = arith.addf %78, %77 : vector<8x128xf32>
    %80 = arith.divf %78, %79 : vector<8x128xf32>
    %81 = arith.mulf %75, %80 : vector<8x128xf32>
    %c0_40 = arith.constant 0 : index
    %c0_41 = arith.constant 0 : index
    %82 = vector.load %arg17[%c0_40, %c0_41] : memref<128x128xf32, #tpu.memory_space<vmem>>, vector<128x128xf32>
    %cst_42 = arith.constant dense<0.000000e+00> : vector<8x128xf32>
    %83 = tpu.matmul %81, %82, %cst_42 {dimension_numbers = #tpu.dot_dimension_numbers<[1], [0], [0], [1], [0, 0, 1, 1], [], []>} : vector<8x128xf32>, vector<128x128xf32>, vector<8x128xf32> -> vector<8x128xf32>
    %c0_43 = arith.constant 0 : index
    %c0_44 = arith.constant 0 : index
    %84 = vector.load %arg18[%c0_43, %c0_44] : memref<1x128xf32, #tpu.memory_space<vmem>>, vector<1x128xf32>
    %85 = vector.broadcast %84 : vector<1x128xf32> to vector<8x128xf32>
    %86 = arith.addf %83, %85 : vector<8x128xf32>
    %87 = arith.negf %86 : vector<8x128xf32>
    %88 = math.exp %87 : vector<8x128xf32>
    %cst_45 = arith.constant 1.000000e+00 : f32
    %89 = vector.broadcast %cst_45 : f32 to vector<8x128xf32>
    %90 = arith.addf %89, %88 : vector<8x128xf32>
    %91 = arith.divf %89, %90 : vector<8x128xf32>
    %92 = arith.mulf %86, %91 : vector<8x128xf32>
    %c0_46 = arith.constant 0 : index
    %c0_47 = arith.constant 0 : index
    %93 = vector.load %arg19[%c0_46, %c0_47] : memref<128x128xf32, #tpu.memory_space<vmem>>, vector<128x128xf32>
    %cst_48 = arith.constant dense<0.000000e+00> : vector<8x128xf32>
    %94 = tpu.matmul %92, %93, %cst_48 {dimension_numbers = #tpu.dot_dimension_numbers<[1], [0], [0], [1], [0, 0, 1, 1], [], []>} : vector<8x128xf32>, vector<128x128xf32>, vector<8x128xf32> -> vector<8x128xf32>
    %c0_49 = arith.constant 0 : index
    %c0_50 = arith.constant 0 : index
    %95 = vector.load %arg20[%c0_49, %c0_50] : memref<1x128xf32, #tpu.memory_space<vmem>>, vector<1x128xf32>
    %96 = vector.broadcast %95 : vector<1x128xf32> to vector<8x128xf32>
    %97 = arith.addf %94, %96 : vector<8x128xf32>
    %98 = arith.negf %97 : vector<8x128xf32>
    %99 = math.exp %98 : vector<8x128xf32>
    %cst_51 = arith.constant 1.000000e+00 : f32
    %100 = vector.broadcast %cst_51 : f32 to vector<8x128xf32>
    %101 = arith.addf %100, %99 : vector<8x128xf32>
    %102 = arith.divf %100, %101 : vector<8x128xf32>
    %103 = arith.mulf %97, %102 : vector<8x128xf32>
    %c0_52 = arith.constant 0 : index
    %c0_53 = arith.constant 0 : index
    %104 = vector.load %arg21[%c0_52, %c0_53] : memref<128x128xf32, #tpu.memory_space<vmem>>, vector<128x128xf32>
    %cst_54 = arith.constant dense<0.000000e+00> : vector<8x128xf32>
    %105 = tpu.matmul %103, %104, %cst_54 {dimension_numbers = #tpu.dot_dimension_numbers<[1], [0], [0], [1], [0, 0, 1, 1], [], []>} : vector<8x128xf32>, vector<128x128xf32>, vector<8x128xf32> -> vector<8x128xf32>
    %c0_55 = arith.constant 0 : index
    %c0_56 = arith.constant 0 : index
    %106 = vector.load %arg22[%c0_55, %c0_56] : memref<1x128xf32, #tpu.memory_space<vmem>>, vector<1x128xf32>
    %107 = vector.broadcast %106 : vector<1x128xf32> to vector<8x128xf32>
    %108 = arith.addf %105, %107 : vector<8x128xf32>
    %109 = arith.negf %108 : vector<8x128xf32>
    %110 = math.exp %109 : vector<8x128xf32>
    %cst_57 = arith.constant 1.000000e+00 : f32
    %111 = vector.broadcast %cst_57 : f32 to vector<8x128xf32>
    %112 = arith.addf %111, %110 : vector<8x128xf32>
    %113 = arith.divf %111, %112 : vector<8x128xf32>
    %114 = arith.mulf %108, %113 : vector<8x128xf32>
    %c0_58 = arith.constant 0 : index
    %c0_59 = arith.constant 0 : index
    %115 = vector.load %arg23[%c0_58, %c0_59] : memref<128x768xf32, #tpu.memory_space<vmem>>, vector<128x768xf32>
    %cst_60 = arith.constant dense<0.000000e+00> : vector<8x768xf32>
    %116 = tpu.matmul %114, %115, %cst_60 {dimension_numbers = #tpu.dot_dimension_numbers<[1], [0], [0], [1], [0, 0, 1, 1], [], []>} : vector<8x128xf32>, vector<128x768xf32>, vector<8x768xf32> -> vector<8x768xf32>
    %c0_61 = arith.constant 0 : index
    %c0_62 = arith.constant 0 : index
    %117 = vector.load %arg24[%c0_61, %c0_62] : memref<1x768xf32, #tpu.memory_space<vmem>>, vector<1x768xf32>
    %118 = vector.broadcast %117 : vector<1x768xf32> to vector<8x768xf32>
    %119 = arith.addf %116, %118 : vector<8x768xf32>
    %cst_63 = arith.constant 0.000000e+00 : f32
    %120 = vector.broadcast %cst_63 : f32 to vector<8x768xf32>
    %121 = arith.subf %120, %119 : vector<8x768xf32>
    %cst_64 = arith.constant 0.000000e+00 : f32
    %122 = vector.broadcast %cst_64 : f32 to vector<8x768xf32>
    %123 = arith.maximumf %121, %122 : vector<8x768xf32>
    %124 = vector.broadcast %cst_64 : f32 to vector<8x768xf32>
    %125 = arith.subf %121, %124 : vector<8x768xf32>
    %126 = arith.cmpf one, %125, %125 : vector<8x768xf32>
    %127 = vector.broadcast %cst_64 : f32 to vector<8x768xf32>
    %128 = arith.addf %121, %127 : vector<8x768xf32>
    %129 = math.absf %125 : vector<8x768xf32>
    %cst_65 = arith.constant 0.000000e+00 : f32
    %130 = vector.broadcast %cst_65 : f32 to vector<8x768xf32>
    %131 = arith.subf %130, %129 : vector<8x768xf32>
    %132 = math.exp %131 : vector<8x768xf32>
    %133 = math.log1p %132 : vector<8x768xf32>
    %134 = arith.addf %123, %133 : vector<8x768xf32>
    %135 = arith.select %126, %128, %134 : vector<8x768xi1>, vector<8x768xf32>
    %cst_66 = arith.constant 0.000000e+00 : f32
    %136 = vector.broadcast %cst_66 : f32 to vector<8x768xf32>
    %137 = arith.subf %136, %135 : vector<8x768xf32>
    %138 = math.exp %137 : vector<8x768xf32>
    %cst_67 = arith.constant -1.000000e+02 : f32
    %139 = vector.broadcast %cst_67 : f32 to vector<8x768xf32>
    %140 = arith.maximumf %137, %139 : vector<8x768xf32>
    %141 = arith.subf %137, %119 : vector<8x768xf32>
    %cst_68 = arith.constant -1.000000e+02 : f32
    %142 = vector.broadcast %cst_68 : f32 to vector<8x768xf32>
    %143 = arith.maximumf %141, %142 : vector<8x768xf32>
    %144 = arith.mulf %0, %140 : vector<8x768xf32>
    %cst_69 = arith.constant 1.000000e+00 : f32
    %145 = vector.broadcast %cst_69 : f32 to vector<8x768xf32>
    %146 = arith.subf %145, %0 : vector<8x768xf32>
    %147 = arith.mulf %146, %143 : vector<8x768xf32>
    %148 = arith.addf %144, %147 : vector<8x768xf32>
    %cst_70 = arith.constant 0.000000e+00 : f32
    %149 = vector.broadcast %cst_70 : f32 to vector<8x768xf32>
    %150 = arith.subf %149, %148 : vector<8x768xf32>
    %cst_71 = arith.constant dense<0.000000e+00> : vector<8xf32>
    %151 = vector.multi_reduction <add>, %150, %cst_71 [1] : vector<8x768xf32> to vector<8xf32>
    %152 = vector.shape_cast %151 : vector<8xf32> to vector<8x1xf32>
    %153 = arith.mulf %68, %68 : vector<8x128xf32>
    %154 = arith.mulf %51, %51 : vector<8x128xf32>
    %155 = arith.addf %153, %154 : vector<8x128xf32>
    %cst_72 = arith.constant 1.000000e+00 : f32
    %156 = vector.broadcast %cst_72 : f32 to vector<8x128xf32>
    %157 = arith.subf %155, %156 : vector<8x128xf32>
    %158 = math.log %68 : vector<8x128xf32>
    %cst_73 = arith.constant 2.000000e+00 : f32
    %159 = vector.broadcast %cst_73 : f32 to vector<8x128xf32>
    %160 = arith.mulf %159, %158 : vector<8x128xf32>
    %161 = arith.subf %157, %160 : vector<8x128xf32>
    %cst_74 = arith.constant 5.000000e-01 : f32
    %162 = vector.broadcast %cst_74 : f32 to vector<8x128xf32>
    %163 = arith.mulf %162, %161 : vector<8x128xf32>
    %c0_75 = arith.constant 0 : index
    %c0_76 = arith.constant 0 : index
    %164 = vector.load %arg4[%c0_75, %c0_76] : memref<1x128xf32, #tpu.memory_space<vmem>>, vector<1x128xf32>
    %165 = vector.broadcast %164 : vector<1x128xf32> to vector<8x128xf32>
    %166 = arith.mulf %163, %165 : vector<8x128xf32>
    %cst_77 = arith.constant dense<0.000000e+00> : vector<8xf32>
    %167 = vector.multi_reduction <add>, %166, %cst_77 [1] : vector<8x128xf32> to vector<8xf32>
    %168 = vector.shape_cast %167 : vector<8xf32> to vector<8x1xf32>
    %169 = tpu.iota {dimensions = array<i32: 0>} : vector<8x1xi32>
    %c8_i32 = arith.constant 8 : i32
    %170 = arith.muli %arg0, %c8_i32 : i32
    %171 = vector.broadcast %170 : i32 to vector<8x1xi32>
    %172 = arith.addi %169, %171 : vector<8x1xi32>
    %c2_i32 = arith.constant 2 : i32
    %173 = vector.broadcast %c2_i32 : i32 to vector<8x1xi32>
    %174 = arith.cmpi slt, %172, %173 : vector<8x1xi32>
    %175 = arith.extui %174 : vector<8x1xi1> to vector<8x1xi32>
    %176 = arith.sitofp %175 : vector<8x1xi32> to vector<8x1xf32>
    %177 = arith.mulf %152, %176 : vector<8x1xf32>
    %cst_78 = arith.constant dense<0.000000e+00> : vector<1xf32>
    %178 = vector.multi_reduction <add>, %177, %cst_78 [0] : vector<8x1xf32> to vector<1xf32>
    %179 = vector.shape_cast %178 : vector<1xf32> to vector<1x1xf32>
    %180 = arith.mulf %168, %176 : vector<8x1xf32>
    %cst_79 = arith.constant dense<0.000000e+00> : vector<1xf32>
    %181 = vector.multi_reduction <add>, %180, %cst_79 [0] : vector<8x1xf32> to vector<1xf32>
    %182 = vector.shape_cast %181 : vector<1xf32> to vector<1x1xf32>
    %183 = vector.shape_cast %179 : vector<1x1xf32> to vector<1x1xf32>
    %184 = vector.broadcast %183 : vector<1x1xf32> to vector<8x128xf32>
    %c0_80 = arith.constant 0 : index
    %c0_81 = arith.constant 0 : index
    %185 = vector.load %arg29[%c0_80, %c0_81] : memref<8x128xf32, #tpu.memory_space<vmem>>, vector<8x128xf32>
    tpu.vector_store %arg29[%c0_80, %c0_81], %184 {strides = array<i32>} : memref<8x128xf32, #tpu.memory_space<vmem>>, vector<8x128xf32>,
    %186 = vector.shape_cast %182 : vector<1x1xf32> to vector<1x1xf32>
    %187 = vector.broadcast %186 : vector<1x1xf32> to vector<8x128xf32>
    %c0_82 = arith.constant 0 : index
    %c0_83 = arith.constant 0 : index
    %188 = vector.load %arg30[%c0_82, %c0_83] : memref<8x128xf32, #tpu.memory_space<vmem>>, vector<8x128xf32>
    tpu.vector_store %arg30[%c0_82, %c0_83], %187 {strides = array<i32>} : memref<8x128xf32, #tpu.memory_space<vmem>>, vector<8x128xf32>,
    %c0_84 = arith.constant 0 : index
    %c0_85 = arith.constant 0 : index
    %189 = vector.load %arg25[%c0_84, %c0_85] : memref<8x128xf32, #tpu.memory_space<vmem>>, vector<8x128xf32>
    tpu.vector_store %arg25[%c0_84, %c0_85], %51 {strides = array<i32>} : memref<8x128xf32, #tpu.memory_space<vmem>>, vector<8x128xf32>,
    %c0_86 = arith.constant 0 : index
    %c0_87 = arith.constant 0 : index
    %190 = vector.load %arg26[%c0_86, %c0_87] : memref<8x128xf32, #tpu.memory_space<vmem>>, vector<8x128xf32>
    tpu.vector_store %arg26[%c0_86, %c0_87], %68 {strides = array<i32>} : memref<8x128xf32, #tpu.memory_space<vmem>>, vector<8x128xf32>,
    %c0_88 = arith.constant 0 : index
    %c0_89 = arith.constant 0 : index
    %191 = vector.load %arg27[%c0_88, %c0_89] : memref<8x128xf32, #tpu.memory_space<vmem>>, vector<8x128xf32>
    tpu.vector_store %arg27[%c0_88, %c0_89], %70 {strides = array<i32>} : memref<8x128xf32, #tpu.memory_space<vmem>>, vector<8x128xf32>,
    %c0_90 = arith.constant 0 : index
    %c0_91 = arith.constant 0 : index
    %192 = vector.load %arg28[%c0_90, %c0_91] : memref<8x768xf32, #tpu.memory_space<vmem>>, vector<8x768xf32>
    tpu.vector_store %arg28[%c0_90, %c0_91], %138 {strides = array<i32>} : memref<8x768xf32, #tpu.memory_space<vmem>>, vector<8x768xf32>,
    return
  }
  func.func @transform_0(%arg0: i32) -> (i32, i32) {
    %c0_i32 = arith.constant 0 : i32
    %c0_i32_0 = arith.constant 0 : i32
    return %arg0, %c0_i32 : i32, i32
  }
  func.func @transform_1(%arg0: i32) -> (i32, i32) {
    %c0_i32 = arith.constant 0 : i32
    %c0_i32_0 = arith.constant 0 : i32
    return %arg0, %c0_i32 : i32, i32
  }
  func.func @transform_2(%arg0: i32) -> (i32, i32) {
    %c0_i32 = arith.constant 0 : i32
    %c0_i32_0 = arith.constant 0 : i32
    %c0_i32_1 = arith.constant 0 : i32
    return %c0_i32, %c0_i32_0 : i32, i32
  }
  func.func @transform_3(%arg0: i32) -> (i32, i32) {
    %c0_i32 = arith.constant 0 : i32
    %c0_i32_0 = arith.constant 0 : i32
    %c0_i32_1 = arith.constant 0 : i32
    return %c0_i32, %c0_i32_0 : i32, i32
  }
  func.func @transform_4(%arg0: i32) -> (i32, i32) {
    %c0_i32 = arith.constant 0 : i32
    %c0_i32_0 = arith.constant 0 : i32
    %c0_i32_1 = arith.constant 0 : i32
    return %c0_i32, %c0_i32_0 : i32, i32
  }
  func.func @transform_5(%arg0: i32) -> (i32, i32) {
    %c0_i32 = arith.constant 0 : i32
    %c0_i32_0 = arith.constant 0 : i32
    %c0_i32_1 = arith.constant 0 : i32
    return %c0_i32, %c0_i32_0 : i32, i32
  }
  func.func @transform_6(%arg0: i32) -> (i32, i32) {
    %c0_i32 = arith.constant 0 : i32
    %c0_i32_0 = arith.constant 0 : i32
    %c0_i32_1 = arith.constant 0 : i32
    return %c0_i32, %c0_i32_0 : i32, i32
  }
  func.func @transform_7(%arg0: i32) -> (i32, i32) {
    %c0_i32 = arith.constant 0 : i32
    %c0_i32_0 = arith.constant 0 : i32
    %c0_i32_1 = arith.constant 0 : i32
    return %c0_i32, %c0_i32_0 : i32, i32
  }
  func.func @transform_8(%arg0: i32) -> (i32, i32) {
    %c0_i32 = arith.constant 0 : i32
    %c0_i32_0 = arith.constant 0 : i32
    %c0_i32_1 = arith.constant 0 : i32
    return %c0_i32, %c0_i32_0 : i32, i32
  }
  func.func @transform_9(%arg0: i32) -> (i32, i32) {
    %c0_i32 = arith.constant 0 : i32
    %c0_i32_0 = arith.constant 0 : i32
    %c0_i32_1 = arith.constant 0 : i32
    return %c0_i32, %c0_i32_0 : i32, i32
  }
  func.func @transform_10(%arg0: i32) -> (i32, i32) {
    %c0_i32 = arith.constant 0 : i32
    %c0_i32_0 = arith.constant 0 : i32
    %c0_i32_1 = arith.constant 0 : i32
    return %c0_i32, %c0_i32_0 : i32, i32
  }
  func.func @transform_11(%arg0: i32) -> (i32, i32) {
    %c0_i32 = arith.constant 0 : i32
    %c0_i32_0 = arith.constant 0 : i32
    %c0_i32_1 = arith.constant 0 : i32
    return %c0_i32, %c0_i32_0 : i32, i32
  }
  func.func @transform_12(%arg0: i32) -> (i32, i32) {
    %c0_i32 = arith.constant 0 : i32
    %c0_i32_0 = arith.constant 0 : i32
    %c0_i32_1 = arith.constant 0 : i32
    return %c0_i32, %c0_i32_0 : i32, i32
  }
  func.func @transform_13(%arg0: i32) -> (i32, i32) {
    %c0_i32 = arith.constant 0 : i32
    %c0_i32_0 = arith.constant 0 : i32
    %c0_i32_1 = arith.constant 0 : i32
    return %c0_i32, %c0_i32_0 : i32, i32
  }
  func.func @transform_14(%arg0: i32) -> (i32, i32) {
    %c0_i32 = arith.constant 0 : i32
    %c0_i32_0 = arith.constant 0 : i32
    %c0_i32_1 = arith.constant 0 : i32
    return %c0_i32, %c0_i32_0 : i32, i32
  }
  func.func @transform_15(%arg0: i32) -> (i32, i32) {
    %c0_i32 = arith.constant 0 : i32
    %c0_i32_0 = arith.constant 0 : i32
    %c0_i32_1 = arith.constant 0 : i32
    return %c0_i32, %c0_i32_0 : i32, i32
  }
  func.func @transform_16(%arg0: i32) -> (i32, i32) {
    %c0_i32 = arith.constant 0 : i32
    %c0_i32_0 = arith.constant 0 : i32
    %c0_i32_1 = arith.constant 0 : i32
    return %c0_i32, %c0_i32_0 : i32, i32
  }
  func.func @transform_17(%arg0: i32) -> (i32, i32) {
    %c0_i32 = arith.constant 0 : i32
    %c0_i32_0 = arith.constant 0 : i32
    %c0_i32_1 = arith.constant 0 : i32
    return %c0_i32, %c0_i32_0 : i32, i32
  }
  func.func @transform_18(%arg0: i32) -> (i32, i32) {
    %c0_i32 = arith.constant 0 : i32
    %c0_i32_0 = arith.constant 0 : i32
    %c0_i32_1 = arith.constant 0 : i32
    return %c0_i32, %c0_i32_0 : i32, i32
  }
  func.func @transform_19(%arg0: i32) -> (i32, i32) {
    %c0_i32 = arith.constant 0 : i32
    %c0_i32_0 = arith.constant 0 : i32
    %c0_i32_1 = arith.constant 0 : i32
    return %c0_i32, %c0_i32_0 : i32, i32
  }
  func.func @transform_20(%arg0: i32) -> (i32, i32) {
    %c0_i32 = arith.constant 0 : i32
    %c0_i32_0 = arith.constant 0 : i32
    %c0_i32_1 = arith.constant 0 : i32
    return %c0_i32, %c0_i32_0 : i32, i32
  }
  func.func @transform_21(%arg0: i32) -> (i32, i32) {
    %c0_i32 = arith.constant 0 : i32
    %c0_i32_0 = arith.constant 0 : i32
    %c0_i32_1 = arith.constant 0 : i32
    return %c0_i32, %c0_i32_0 : i32, i32
  }
  func.func @transform_22(%arg0: i32) -> (i32, i32) {
    %c0_i32 = arith.constant 0 : i32
    %c0_i32_0 = arith.constant 0 : i32
    %c0_i32_1 = arith.constant 0 : i32
    return %c0_i32, %c0_i32_0 : i32, i32
  }
  func.func @transform_23(%arg0: i32) -> (i32, i32) {
    %c0_i32 = arith.constant 0 : i32
    %c0_i32_0 = arith.constant 0 : i32
    %c0_i32_1 = arith.constant 0 : i32
    return %c0_i32, %c0_i32_0 : i32, i32
  }
  func.func @transform_24(%arg0: i32) -> (i32, i32) {
    %c0_i32 = arith.constant 0 : i32
    %c0_i32_0 = arith.constant 0 : i32
    return %arg0, %c0_i32 : i32, i32
  }
  func.func @transform_25(%arg0: i32) -> (i32, i32) {
    %c0_i32 = arith.constant 0 : i32
    %c0_i32_0 = arith.constant 0 : i32
    return %arg0, %c0_i32 : i32, i32
  }
  func.func @transform_26(%arg0: i32) -> (i32, i32) {
    %c0_i32 = arith.constant 0 : i32
    %c0_i32_0 = arith.constant 0 : i32
    return %arg0, %c0_i32 : i32, i32
  }
  func.func @transform_27(%arg0: i32) -> (i32, i32) {
    %c0_i32 = arith.constant 0 : i32
    %c0_i32_0 = arith.constant 0 : i32
    return %arg0, %c0_i32 : i32, i32
  }
  func.func @transform_28(%arg0: i32) -> (i32, i32) {
    %c0_i32 = arith.constant 0 : i32
    %c0_i32_0 = arith.constant 0 : i32
    return %arg0, %c0_i32 : i32, i32
  }
  func.func @transform_29(%arg0: i32) -> (i32, i32) {
    %c0_i32 = arith.constant 0 : i32
    %c0_i32_0 = arith.constant 0 : i32
    return %arg0, %c0_i32 : i32, i32
  }
}

</mosaic_0001>

<llo_original>
// kernel: tpu_custom_call.1
$region0: #{tpu_custom_call.1}
  #allocation0 [shape = 'u32[]', space=smem, size = 0x4, offset = 0x4, fixed_abs, tag = 'smem constant byte address 0x4 - core index']
  #allocation1 [shape = 'u32[144,128]{1,0:T(1,128)}', space=vmem, size = 0x12000, scoped, tag = 'internal scratch']
  %s0 = inlined_call_operand.smem [shape: u32[30], index: -1, kind: input, shape index: {}]
  %s1 = sld [smem:[%s0]]
  %s2 = scalar_lea.smem %s0, 1
  %s3 = sld [smem:[%s2]]
  %s4 = scalar_lea.smem %s0, 2
  %s5 = sld [smem:[%s4]]
  %s6 = scalar_lea.smem %s0, 3
  %s7 = sld [smem:[%s6]]
  %s8 = scalar_lea.smem %s0, 4
  %s9 = sld [smem:[%s8]]
  %s10 = scalar_lea.smem %s0, 5
  %s11 = sld [smem:[%s10]]
  %s12 = scalar_lea.smem %s0, 6
  %s13 = sld [smem:[%s12]]
  %s14 = scalar_lea.smem %s0, 7
  %s15 = sld [smem:[%s14]]
  %s16 = scalar_lea.smem %s0, 8
  %s17 = sld [smem:[%s16]]
  %s18 = scalar_lea.smem %s0, 9
  %s19 = sld [smem:[%s18]]
  %s20 = scalar_lea.smem %s0, 10
  %s21 = sld [smem:[%s20]]
  %s22 = scalar_lea.smem %s0, 11
  %s23 = sld [smem:[%s22]]
  %s24 = scalar_lea.smem %s0, 12
  %s25 = sld [smem:[%s24]]
  %s26 = scalar_lea.smem %s0, 13
  %s27 = sld [smem:[%s26]]
  %s28 = scalar_lea.smem %s0, 14
  %s29 = sld [smem:[%s28]]
  %s30 = scalar_lea.smem %s0, 15
  %s31 = sld [smem:[%s30]]
  %s32 = scalar_lea.smem %s0, 16
  %s33 = sld [smem:[%s32]]
  %s34 = scalar_lea.smem %s0, 17
  %s35 = sld [smem:[%s34]]
  %s36 = scalar_lea.smem %s0, 18
  %s37 = sld [smem:[%s36]]
  %s38 = scalar_lea.smem %s0, 19
  %s39 = sld [smem:[%s38]]
  %s40 = scalar_lea.smem %s0, 20
  %s41 = sld [smem:[%s40]]
  %s42 = scalar_lea.smem %s0, 21
  %s43 = sld [smem:[%s42]]
  %s44 = scalar_lea.smem %s0, 22
  %s45 = sld [smem:[%s44]]
  %s46 = scalar_lea.smem %s0, 23
  %s47 = sld [smem:[%s46]]
  %s48 = scalar_lea.smem %s0, 24
  %s49 = sld [smem:[%s48]]
  %s50 = scalar_lea.smem %s0, 25
  %s51 = sld [smem:[%s50]]
  %s52 = scalar_lea.smem %s0, 26
  %s53 = sld [smem:[%s52]]
  %s54 = scalar_lea.smem %s0, 27
  %s55 = sld [smem:[%s54]]
  %s56 = scalar_lea.smem %s0, 28
  %s57 = sld [smem:[%s56]]
  %s58 = scalar_lea.smem %s0, 29
  %s59 = sld [smem:[%s58]]
  %60 = xla_tuple %s49, %s51, %s53, %s55, %s57, %s59
  %s61 = sld [smem:[#allocation0]]
  $region194: #{tpu_custom_call.1} parent=0
    _
  %s63 = ssub.s32 1, %s61
  %s64 = scalar_select 0, %s63, %s61
  $region1: #{tpu_custom_call.1} parent=0
    #allocation2 [shape = 'u8[24576]{0}', space=vmem, size = 0x6000, scoped, tag = 'input window, operand 0, single buffered']
    #allocation3 [shape = 's32[1]{0}', space=sflag, size = 0x4, scoped, tag = 'scoped memory for tpu_custom_call.1']
    #allocation4 [shape = 's32[1]{0}', space=sflag, size = 0x4, scoped, tag = 'scoped memory for tpu_custom_call.1']
    #allocation5 [shape = 'u8[4096]{0}', space=vmem, size = 0x1000, scoped, tag = 'input window, operand 1, single buffered']
    #allocation6 [shape = 's32[1]{0}', space=sflag, size = 0x4, scoped, tag = 'scoped memory for tpu_custom_call.1']
    #allocation7 [shape = 'u8[393216]{0}', space=vmem, size = 0x60000, scoped, tag = 'input window, operand 4, single buffered']
    #allocation8 [shape = 'u8[65536]{0}', space=vmem, size = 0x10000, scoped, tag = 'input window, operand 6, single buffered']
    #allocation9 [shape = 's32[1]{0}', space=sflag, size = 0x4, scoped, tag = 'scoped memory for tpu_custom_call.1']
    #allocation10 [shape = 'u8[65536]{0}', space=vmem, size = 0x10000, scoped, tag = 'input window, operand 8, single buffered']
    #allocation11 [shape = 'u8[65536]{0}', space=vmem, size = 0x10000, scoped, tag = 'input window, operand 10, single buffered']
    #allocation12 [shape = 's32[1]{0}', space=sflag, size = 0x4, scoped, tag = 'scoped memory for tpu_custom_call.1']
    #allocation13 [shape = 'u8[131072]{0}', space=vmem, size = 0x20000, scoped, tag = 'input window, operand 12, single buffered']
    #allocation14 [shape = 'u8[65536]{0}', space=vmem, size = 0x10000, scoped, tag = 'input window, operand 14, single buffered']
    #allocation15 [shape = 's32[1]{0}', space=sflag, size = 0x4, scoped, tag = 'scoped memory for tpu_custom_call.1']
    #allocation16 [shape = 'u8[65536]{0}', space=vmem, size = 0x10000, scoped, tag = 'input window, operand 16, single buffered']
    #allocation17 [shape = 'u8[65536]{0}', space=vmem, size = 0x10000, scoped, tag = 'input window, operand 18, single buffered']
    #allocation18 [shape = 's32[1]{0}', space=sflag, size = 0x4, scoped, tag = 'scoped memory for tpu_custom_call.1']
    #allocation19 [shape = 'u8[65536]{0}', space=vmem, size = 0x10000, scoped, tag = 'input window, operand 20, single buffered']
    #allocation20 [shape = 'u8[393216]{0}', space=vmem, size = 0x60000, scoped, tag = 'input window, operand 22, single buffered']
    #allocation21 [shape = 's32[1]{0}', space=sflag, size = 0x4, scoped, tag = 'scoped memory for tpu_custom_call.1']
    #allocation22 [shape = 'u8[4096]{0}', space=vmem, size = 0x1000, scoped, tag = 'output window, operand 0, single buffered']
    #allocation23 [shape = 'u8[4096]{0}', space=vmem, size = 0x1000, scoped, tag = 'output window, operand 1, single buffered']
    #allocation24 [shape = 's32[1]{0}', space=sflag, size = 0x4, scoped, tag = 'scoped memory for tpu_custom_call.1']
    #allocation25 [shape = 'u8[4096]{0}', space=vmem, size = 0x1000, scoped, tag = 'output window, operand 2, single buffered']
    #allocation26 [shape = 'u8[24576]{0}', space=vmem, size = 0x6000, scoped, tag = 'output window, operand 3, single buffered']
    #allocation27 [shape = 's32[1]{0}', space=sflag, size = 0x4, scoped, tag = 'scoped memory for tpu_custom_call.1']
    #allocation28 [shape = 'u8[4096]{0}', space=vmem, size = 0x1000, scoped, tag = 'output window, operand 4, single buffered']
    #allocation29 [shape = 'u8[4096]{0}', space=vmem, size = 0x1000, scoped, tag = 'output window, operand 5, single buffered']
    #allocation30 [shape = 's32[1]{0}', space=sflag, size = 0x4, scoped, tag = 'scoped memory for tpu_custom_call.1']
    %65 = vsyncpa [#allocation3], 0
    %66 = vsyncpa [#allocation6], 0
    %67 = vsyncpa [#allocation9], 0
    %68 = vsyncpa [#allocation12], 0
    %69 = vsyncpa [#allocation15], 0
    %70 = vsyncpa [#allocation18], 0
    %71 = vsyncpa [#allocation21], 0
    %72 = vsyncpa [#allocation4], 0
    %73 = vsyncpa [#allocation24], 0
    %74 = vsyncpa [#allocation27], 0
    %75 = vsyncpa [#allocation30], 0
    // Predicated region
    $region2: #{tpu_custom_call.1} parent=1 // pred_check
      _
    $region3: #{tpu_custom_call.1} parent=1 // pred_check_branch
      %77 = sbr.rel (0) target = $region5
    $region4: #{tpu_custom_call.1} parent=1 // pred_region
      %s79 = ssub.s32 768, 768
      %80 = vsyncadd [#allocation3], %s79
      %s82 = sshll.u32 [#allocation2], 4
      %s83 = int_to_ptr.vmem [resolvable:$true] %s82
      %85 = dma.hbm_to_vmem [thread:$0]  %s1, 768, %s83, [#allocation3]
    $region5: #{tpu_custom_call.1} parent=1 // pred_fallthru
      _
    // Predicated region
    $region6: #{tpu_custom_call.1} parent=1 // pred_check
      _
    $region7: #{tpu_custom_call.1} parent=1 // pred_check_branch
      %87 = sbr.rel (0) target = $region9
    $region8: #{tpu_custom_call.1} parent=1 // pred_region
      %s89 = ssub.s32 128, 128
      %90 = vsyncadd [#allocation6], %s89
      %s92 = sshll.u32 [#allocation5], 4
      %s93 = int_to_ptr.vmem [resolvable:$true] %s92
      %95 = dma.hbm_to_vmem [thread:$0]  %s3, 128, %s93, [#allocation6]
    $region9: #{tpu_custom_call.1} parent=1 // pred_fallthru
      _
    // Predicated region
    $region10: #{tpu_custom_call.1} parent=1 // pred_check
      _
    $region11: #{tpu_custom_call.1} parent=1 // pred_check_branch
      %97 = sbr.rel (0) target = $region13
    $region12: #{tpu_custom_call.1} parent=1 // pred_region
      _
    $region13: #{tpu_custom_call.1} parent=1 // pred_fallthru
      _
    // Predicated region
    $region14: #{tpu_custom_call.1} parent=1 // pred_check
      _
    $region15: #{tpu_custom_call.1} parent=1 // pred_check_branch
      %99 = sbr.rel (0) target = $region17
    $region16: #{tpu_custom_call.1} parent=1 // pred_region
      _
    $region17: #{tpu_custom_call.1} parent=1 // pred_fallthru
      _
    // Predicated region
    $region18: #{tpu_custom_call.1} parent=1 // pred_check
      _
    $region19: #{tpu_custom_call.1} parent=1 // pred_check_branch
      %101 = sbr.rel (0) target = $region21
    $region20: #{tpu_custom_call.1} parent=1 // pred_region
      %s103 = ssub.s32 12288, 12288
      %104 = vsyncadd [#allocation6], %s103
      %s105 = sshll.u32 [#allocation7], 4
      %s106 = int_to_ptr.vmem [resolvable:$true] %s105
      %111 = dma.hbm_to_vmem [thread:$0]  %s9, 12288, %s106, [#allocation6], 128, 128, 8
    $region21: #{tpu_custom_call.1} parent=1 // pred_fallthru
      _
    // Predicated region
    $region22: #{tpu_custom_call.1} parent=1 // pred_check
      _
    $region23: #{tpu_custom_call.1} parent=1 // pred_check_branch
      %113 = sbr.rel (0) target = $region25
    $region24: #{tpu_custom_call.1} parent=1 // pred_region
      _
    $region25: #{tpu_custom_call.1} parent=1 // pred_fallthru
      _
    // Predicated region
    $region26: #{tpu_custom_call.1} parent=1 // pred_check
      _
    $region27: #{tpu_custom_call.1} parent=1 // pred_check_branch
      %115 = sbr.rel (0) target = $region29
    $region28: #{tpu_custom_call.1} parent=1 // pred_region
      %s117 = ssub.s32 2048, 2048
      %118 = vsyncadd [#allocation9], %s117
      %s119 = sshll.u32 [#allocation8], 4
      %s120 = int_to_ptr.vmem [resolvable:$true] %s119
      %125 = dma.hbm_to_vmem [thread:$0]  %s13, 2048, %s120, [#allocation9], 128, 128, 8
    $region29: #{tpu_custom_call.1} parent=1 // pred_fallthru
      _
    // Predicated region
    $region30: #{tpu_custom_call.1} parent=1 // pred_check
      _
    $region31: #{tpu_custom_call.1} parent=1 // pred_check_branch
      %127 = sbr.rel (0) target = $region33
    $region32: #{tpu_custom_call.1} parent=1 // pred_region
      _
    $region33: #{tpu_custom_call.1} parent=1 // pred_fallthru
      _
    // Predicated region
    $region34: #{tpu_custom_call.1} parent=1 // pred_check
      _
    $region35: #{tpu_custom_call.1} parent=1 // pred_check_branch
      %129 = sbr.rel (0) target = $region37
    $region36: #{tpu_custom_call.1} parent=1 // pred_region
      %s131 = ssub.s32 2048, 2048
      %132 = vsyncadd [#allocation9], %s131
      %s133 = sshll.u32 [#allocation10], 4
      %s134 = int_to_ptr.vmem [resolvable:$true] %s133
      %139 = dma.hbm_to_vmem [thread:$0]  %s17, 2048, %s134, [#allocation9], 128, 128, 8
    $region37: #{tpu_custom_call.1} parent=1 // pred_fallthru
      _
    // Predicated region
    $region38: #{tpu_custom_call.1} parent=1 // pred_check
      _
    $region39: #{tpu_custom_call.1} parent=1 // pred_check_branch
      %141 = sbr.rel (0) target = $region41
    $region40: #{tpu_custom_call.1} parent=1 // pred_region
      _
    $region41: #{tpu_custom_call.1} parent=1 // pred_fallthru
      _
    // Predicated region
    $region42: #{tpu_custom_call.1} parent=1 // pred_check
      _
    $region43: #{tpu_custom_call.1} parent=1 // pred_check_branch
      %143 = sbr.rel (0) target = $region45
    $region44: #{tpu_custom_call.1} parent=1 // pred_region
      %s145 = ssub.s32 2048, 2048
      %146 = vsyncadd [#allocation12], %s145
      %s147 = sshll.u32 [#allocation11], 4
      %s148 = int_to_ptr.vmem [resolvable:$true] %s147
      %153 = dma.hbm_to_vmem [thread:$0]  %s21, 2048, %s148, [#allocation12], 128, 128, 8
    $region45: #{tpu_custom_call.1} parent=1 // pred_fallthru
      _
    // Predicated region
    $region46: #{tpu_custom_call.1} parent=1 // pred_check
      _
    $region47: #{tpu_custom_call.1} parent=1 // pred_check_branch
      %155 = sbr.rel (0) target = $region49
    $region48: #{tpu_custom_call.1} parent=1 // pred_region
      _
    $region49: #{tpu_custom_call.1} parent=1 // pred_fallthru
      _
    // Predicated region
    $region50: #{tpu_custom_call.1} parent=1 // pred_check
      _
    $region51: #{tpu_custom_call.1} parent=1 // pred_check_branch
      %157 = sbr.rel (0) target = $region53
    $region52: #{tpu_custom_call.1} parent=1 // pred_region
      %s159 = ssub.s32 4096, 4096
      %160 = vsyncadd [#allocation12], %s159
      %s161 = sshll.u32 [#allocation13], 4
      %s162 = int_to_ptr.vmem [resolvable:$true] %s161
      %167 = dma.hbm_to_vmem [thread:$0]  %s25, 4096, %s162, [#allocation12], 256, 256, 16
    $region53: #{tpu_custom_call.1} parent=1 // pred_fallthru
      _
    // Predicated region
    $region54: #{tpu_custom_call.1} parent=1 // pred_check
      _
    $region55: #{tpu_custom_call.1} parent=1 // pred_check_branch
      %169 = sbr.rel (0) target = $region57
    $region56: #{tpu_custom_call.1} parent=1 // pred_region
      _
    $region57: #{tpu_custom_call.1} parent=1 // pred_fallthru
      _
    // Predicated region
    $region58: #{tpu_custom_call.1} parent=1 // pred_check
      _
    $region59: #{tpu_custom_call.1} parent=1 // pred_check_branch
      %171 = sbr.rel (0) target = $region61
    $region60: #{tpu_custom_call.1} parent=1 // pred_region
      %s173 = ssub.s32 2048, 2048
      %174 = vsyncadd [#allocation15], %s173
      %s175 = sshll.u32 [#allocation14], 4
      %s176 = int_to_ptr.vmem [resolvable:$true] %s175
      %181 = dma.hbm_to_vmem [thread:$0]  %s29, 2048, %s176, [#allocation15], 128, 128, 8
    $region61: #{tpu_custom_call.1} parent=1 // pred_fallthru
      _
    // Predicated region
    $region62: #{tpu_custom_call.1} parent=1 // pred_check
      _
    $region63: #{tpu_custom_call.1} parent=1 // pred_check_branch
      %183 = sbr.rel (0) target = $region65
    $region64: #{tpu_custom_call.1} parent=1 // pred_region
      _
    $region65: #{tpu_custom_call.1} parent=1 // pred_fallthru
      _
    // Predicated region
    $region66: #{tpu_custom_call.1} parent=1 // pred_check
      _
    $region67: #{tpu_custom_call.1} parent=1 // pred_check_branch
      %185 = sbr.rel (0) target = $region69
    $region68: #{tpu_custom_call.1} parent=1 // pred_region
      %s187 = ssub.s32 2048, 2048
      %188 = vsyncadd [#allocation15], %s187
      %s189 = sshll.u32 [#allocation16], 4
      %s190 = int_to_ptr.vmem [resolvable:$true] %s189
      %195 = dma.hbm_to_vmem [thread:$0]  %s33, 2048, %s190, [#allocation15], 128, 128, 8
    $region69: #{tpu_custom_call.1} parent=1 // pred_fallthru
      _
    // Predicated region
    $region70: #{tpu_custom_call.1} parent=1 // pred_check
      _
    $region71: #{tpu_custom_call.1} parent=1 // pred_check_branch
      %197 = sbr.rel (0) target = $region73
    $region72: #{tpu_custom_call.1} parent=1 // pred_region
      _
    $region73: #{tpu_custom_call.1} parent=1 // pred_fallthru
      _
    // Predicated region
    $region74: #{tpu_custom_call.1} parent=1 // pred_check
      _
    $region75: #{tpu_custom_call.1} parent=1 // pred_check_branch
      %199 = sbr.rel (0) target = $region77
    $region76: #{tpu_custom_call.1} parent=1 // pred_region
      %s201 = ssub.s32 2048, 2048
      %202 = vsyncadd [#allocation18], %s201
      %s203 = sshll.u32 [#allocation17], 4
      %s204 = int_to_ptr.vmem [resolvable:$true] %s203
      %209 = dma.hbm_to_vmem [thread:$0]  %s37, 2048, %s204, [#allocation18], 128, 128, 8
    $region77: #{tpu_custom_call.1} parent=1 // pred_fallthru
      _
    // Predicated region
    $region78: #{tpu_custom_call.1} parent=1 // pred_check
      _
    $region79: #{tpu_custom_call.1} parent=1 // pred_check_branch
      %211 = sbr.rel (0) target = $region81
    $region80: #{tpu_custom_call.1} parent=1 // pred_region
      _
    $region81: #{tpu_custom_call.1} parent=1 // pred_fallthru
      _
    // Predicated region
    $region82: #{tpu_custom_call.1} parent=1 // pred_check
      _
    $region83: #{tpu_custom_call.1} parent=1 // pred_check_branch
      %213 = sbr.rel (0) target = $region85
    $region84: #{tpu_custom_call.1} parent=1 // pred_region
      %s215 = ssub.s32 2048, 2048
      %216 = vsyncadd [#allocation18], %s215
      %s217 = sshll.u32 [#allocation19], 4
      %s218 = int_to_ptr.vmem [resolvable:$true] %s217
      %223 = dma.hbm_to_vmem [thread:$0]  %s41, 2048, %s218, [#allocation18], 128, 128, 8
    $region85: #{tpu_custom_call.1} parent=1 // pred_fallthru
      _
    // Predicated region
    $region86: #{tpu_custom_call.1} parent=1 // pred_check
      _
    $region87: #{tpu_custom_call.1} parent=1 // pred_check_branch
      %225 = sbr.rel (0) target = $region89
    $region88: #{tpu_custom_call.1} parent=1 // pred_region
      _
    $region89: #{tpu_custom_call.1} parent=1 // pred_fallthru
      _
    // Predicated region
    $region90: #{tpu_custom_call.1} parent=1 // pred_check
      _
    $region91: #{tpu_custom_call.1} parent=1 // pred_check_branch
      %227 = sbr.rel (0) target = $region93
    $region92: #{tpu_custom_call.1} parent=1 // pred_region
      %s229 = ssub.s32 12288, 12288
      %230 = vsyncadd [#allocation21], %s229
      %s231 = sshll.u32 [#allocation20], 4
      %s232 = int_to_ptr.vmem [resolvable:$true] %s231
      %237 = dma.hbm_to_vmem [thread:$0]  %s45, 12288, %s232, [#allocation21], 768, 768, 48
    $region93: #{tpu_custom_call.1} parent=1 // pred_fallthru
      _
    // Predicated region
    $region94: #{tpu_custom_call.1} parent=1 // pred_check
      _
    $region95: #{tpu_custom_call.1} parent=1 // pred_check_branch
      %239 = sbr.rel (0) target = $region97
    $region96: #{tpu_custom_call.1} parent=1 // pred_region
      _
    $region97: #{tpu_custom_call.1} parent=1 // pred_fallthru
      _
    // Predicated region
    $region98: #{tpu_custom_call.1} parent=1 // pred_check
      _
    $region99: #{tpu_custom_call.1} parent=1 // pred_check_branch
      %241 = sbr.rel (0) target = $region101
    $region100: #{tpu_custom_call.1} parent=1 // pred_region
      %242 = dma.done [#allocation3], 768
    $region101: #{tpu_custom_call.1} parent=1 // pred_fallthru
      _
    // Predicated region
    $region102: #{tpu_custom_call.1} parent=1 // pred_check
      _
    $region103: #{tpu_custom_call.1} parent=1 // pred_check_branch
      %244 = sbr.rel (0) target = $region105
    $region104: #{tpu_custom_call.1} parent=1 // pred_region
      %245 = dma.done [#allocation6], 128
    $region105: #{tpu_custom_call.1} parent=1 // pred_fallthru
      _
    // Predicated region
    $region106: #{tpu_custom_call.1} parent=1 // pred_check
      _
    $region107: #{tpu_custom_call.1} parent=1 // pred_check_branch
      %247 = sbr.rel (0) target = $region109
    $region108: #{tpu_custom_call.1} parent=1 // pred_region
      %248 = dma.done [#allocation6], 12288
    $region109: #{tpu_custom_call.1} parent=1 // pred_fallthru
      _
    // Predicated region
    $region110: #{tpu_custom_call.1} parent=1 // pred_check
      _
    $region111: #{tpu_custom_call.1} parent=1 // pred_check_branch
      %250 = sbr.rel (0) target = $region113
    $region112: #{tpu_custom_call.1} parent=1 // pred_region
      %251 = dma.done [#allocation9], 2048
    $region113: #{tpu_custom_call.1} parent=1 // pred_fallthru
      _
    // Predicated region
    $region114: #{tpu_custom_call.1} parent=1 // pred_check
      _
    $region115: #{tpu_custom_call.1} parent=1 // pred_check_branch
      %253 = sbr.rel (0) target = $region117
    $region116: #{tpu_custom_call.1} parent=1 // pred_region
      %254 = dma.done [#allocation9], 2048
    $region117: #{tpu_custom_call.1} parent=1 // pred_fallthru
      _
    // Predicated region
    $region118: #{tpu_custom_call.1} parent=1 // pred_check
      _
    $region119: #{tpu_custom_call.1} parent=1 // pred_check_branch
      %256 = sbr.rel (0) target = $region121
    $region120: #{tpu_custom_call.1} parent=1 // pred_region
      %257 = dma.done [#allocation12], 2048
    $region121: #{tpu_custom_call.1} parent=1 // pred_fallthru
      _
    // Predicated region
    $region122: #{tpu_custom_call.1} parent=1 // pred_check
      _
    $region123: #{tpu_custom_call.1} parent=1 // pred_check_branch
      %259 = sbr.rel (0) target = $region125
    $region124: #{tpu_custom_call.1} parent=1 // pred_region
      %260 = dma.done [#allocation12], 4096
    $region125: #{tpu_custom_call.1} parent=1 // pred_fallthru
      _
    // Predicated region
    $region126: #{tpu_custom_call.1} parent=1 // pred_check
      _
    $region127: #{tpu_custom_call.1} parent=1 // pred_check_branch
      %262 = sbr.rel (0) target = $region129
    $region128: #{tpu_custom_call.1} parent=1 // pred_region
      %263 = dma.done [#allocation15], 2048
    $region129: #{tpu_custom_call.1} parent=1 // pred_fallthru
      _
    // Predicated region
    $region130: #{tpu_custom_call.1} parent=1 // pred_check
      _
    $region131: #{tpu_custom_call.1} parent=1 // pred_check_branch
      %265 = sbr.rel (0) target = $region133
    $region132: #{tpu_custom_call.1} parent=1 // pred_region
      %266 = dma.done [#allocation15], 2048
    $region133: #{tpu_custom_call.1} parent=1 // pred_fallthru
      _
    // Predicated region
    $region134: #{tpu_custom_call.1} parent=1 // pred_check
      _
    $region135: #{tpu_custom_call.1} parent=1 // pred_check_branch
      %268 = sbr.rel (0) target = $region137
    $region136: #{tpu_custom_call.1} parent=1 // pred_region
      %269 = dma.done [#allocation18], 2048
    $region137: #{tpu_custom_call.1} parent=1 // pred_fallthru
      _
    // Predicated region
    $region138: #{tpu_custom_call.1} parent=1 // pred_check
      _
    $region139: #{tpu_custom_call.1} parent=1 // pred_check_branch
      %271 = sbr.rel (0) target = $region141
    $region140: #{tpu_custom_call.1} parent=1 // pred_region
      %272 = dma.done [#allocation18], 2048
    $region141: #{tpu_custom_call.1} parent=1 // pred_fallthru
      _
    // Predicated region
    $region142: #{tpu_custom_call.1} parent=1 // pred_check
      _
    $region143: #{tpu_custom_call.1} parent=1 // pred_check_branch
      %274 = sbr.rel (0) target = $region145
    $region144: #{tpu_custom_call.1} parent=1 // pred_region
      %275 = dma.done [#allocation21], 12288
    $region145: #{tpu_custom_call.1} parent=1 // pred_fallthru
      _
    %v276 = vld [vmem:[#allocation2] sm:$0xff]
    %v277 = vld [vmem:[#allocation2 + $0x8] sm:$0xff]
    %v278 = vld [vmem:[#allocation2 + $0x10] sm:$0xff]
    %v279 = vld [vmem:[#allocation2 + $0x18] sm:$0xff]
    %v280 = vld [vmem:[#allocation2 + $0x20] sm:$0xff]
    %v281 = vld [vmem:[#allocation2 + $0x28] sm:$0xff]
    %v282 = vld [vmem:[#allocation5] sm:$0xff]
    %v283 = vld [vmem:[#allocation7] sm:$0xff]
    %v284 = vld [vmem:[#allocation7 + $0x8] sm:$0xff]
    %v285 = vld [vmem:[#allocation7 + $0x10] sm:$0xff]
    %v286 = vld [vmem:[#allocation7 + $0x18] sm:$0xff]
    %v287 = vld [vmem:[#allocation7 + $0x20] sm:$0xff]
    %v288 = vld [vmem:[#allocation7 + $0x28] sm:$0xff]
    %v289 = vld [vmem:[#allocation7 + $0x30] sm:$0xff]
    %v290 = vld [vmem:[#allocation7 + $0x38] sm:$0xff]
    %v291 = vld [vmem:[#allocation7 + $0x40] sm:$0xff]
    %v292 = vld [vmem:[#allocation7 + $0x48] sm:$0xff]
    %v293 = vld [vmem:[#allocation7 + $0x50] sm:$0xff]
    %v294 = vld [vmem:[#allocation7 + $0x58] sm:$0xff]
    %v295 = vld [vmem:[#allocation7 + $0x60] sm:$0xff]
    %v296 = vld [vmem:[#allocation7 + $0x68] sm:$0xff]
    %v297 = vld [vmem:[#allocation7 + $0x70] sm:$0xff]
    %v298 = vld [vmem:[#allocation7 + $0x78] sm:$0xff]
    %v299 = vld [vmem:[#allocation7 + $0x80] sm:$0xff]
    %v300 = vld [vmem:[#allocation7 + $0x88] sm:$0xff]
    %v301 = vld [vmem:[#allocation7 + $0x90] sm:$0xff]
    %v302 = vld [vmem:[#allocation7 + $0x98] sm:$0xff]
    %v303 = vld [vmem:[#allocation7 + $0xa0] sm:$0xff]
    %v304 = vld [vmem:[#allocation7 + $0xa8] sm:$0xff]
    %v305 = vld [vmem:[#allocation7 + $0xb0] sm:$0xff]
    %v306 = vld [vmem:[#allocation7 + $0xb8] sm:$0xff]
    %v307 = vld [vmem:[#allocation7 + $0xc0] sm:$0xff]
    %v308 = vld [vmem:[#allocation7 + $0xc8] sm:$0xff]
    %v309 = vld [vmem:[#allocation7 + $0xd0] sm:$0xff]
    %v310 = vld [vmem:[#allocation7 + $0xd8] sm:$0xff]
    %v311 = vld [vmem:[#allocation7 + $0xe0] sm:$0xff]
    %v312 = vld [vmem:[#allocation7 + $0xe8] sm:$0xff]
    %v313 = vld [vmem:[#allocation7 + $0xf0] sm:$0xff]
    %v314 = vld [vmem:[#allocation7 + $0xf8] sm:$0xff]
    %v315 = vld [vmem:[#allocation7 + $0x100] sm:$0xff]
    %v316 = vld [vmem:[#allocation7 + $0x108] sm:$0xff]
    %v317 = vld [vmem:[#allocation7 + $0x110] sm:$0xff]
    %v318 = vld [vmem:[#allocation7 + $0x118] sm:$0xff]
    %v319 = vld [vmem:[#allocation7 + $0x120] sm:$0xff]
    %v320 = vld [vmem:[#allocation7 + $0x128] sm:$0xff]
    %v321 = vld [vmem:[#allocation7 + $0x130] sm:$0xff]
    %v322 = vld [vmem:[#allocation7 + $0x138] sm:$0xff]
    %v323 = vld [vmem:[#allocation7 + $0x140] sm:$0xff]
    %v324 = vld [vmem:[#allocation7 + $0x148] sm:$0xff]
    %v325 = vld [vmem:[#allocation7 + $0x150] sm:$0xff]
    %v326 = vld [vmem:[#allocation7 + $0x158] sm:$0xff]
    %v327 = vld [vmem:[#allocation7 + $0x160] sm:$0xff]
    %v328 = vld [vmem:[#allocation7 + $0x168] sm:$0xff]
    %v329 = vld [vmem:[#allocation7 + $0x170] sm:$0xff]
    %v330 = vld [vmem:[#allocation7 + $0x178] sm:$0xff]
    %v331 = vld [vmem:[#allocation7 + $0x180] sm:$0xff]
    %v332 = vld [vmem:[#allocation7 + $0x188] sm:$0xff]
    %v333 = vld [vmem:[#allocation7 + $0x190] sm:$0xff]
    %v334 = vld [vmem:[#allocation7 + $0x198] sm:$0xff]
    %v335 = vld [vmem:[#allocation7 + $0x1a0] sm:$0xff]
    %v336 = vld [vmem:[#allocation7 + $0x1a8] sm:$0xff]
    %v337 = vld [vmem:[#allocation7 + $0x1b0] sm:$0xff]
    %v338 = vld [vmem:[#allocation7 + $0x1b8] sm:$0xff]
    %v339 = vld [vmem:[#allocation7 + $0x1c0] sm:$0xff]
    %v340 = vld [vmem:[#allocation7 + $0x1c8] sm:$0xff]
    %v341 = vld [vmem:[#allocation7 + $0x1d0] sm:$0xff]
    %v342 = vld [vmem:[#allocation7 + $0x1d8] sm:$0xff]
    %v343 = vld [vmem:[#allocation7 + $0x1e0] sm:$0xff]
    %v344 = vld [vmem:[#allocation7 + $0x1e8] sm:$0xff]
    %v345 = vld [vmem:[#allocation7 + $0x1f0] sm:$0xff]
    %v346 = vld [vmem:[#allocation7 + $0x1f8] sm:$0xff]
    %v347 = vld [vmem:[#allocation7 + $0x200] sm:$0xff]
    %v348 = vld [vmem:[#allocation7 + $0x208] sm:$0xff]
    %v349 = vld [vmem:[#allocation7 + $0x210] sm:$0xff]
    %v350 = vld [vmem:[#allocation7 + $0x218] sm:$0xff]
    %v351 = vld [vmem:[#allocation7 + $0x220] sm:$0xff]
    %v352 = vld [vmem:[#allocation7 + $0x228] sm:$0xff]
    %v353 = vld [vmem:[#allocation7 + $0x230] sm:$0xff]
    %v354 = vld [vmem:[#allocation7 + $0x238] sm:$0xff]
    %v355 = vld [vmem:[#allocation7 + $0x240] sm:$0xff]
    %v356 = vld [vmem:[#allocation7 + $0x248] sm:$0xff]
    %v357 = vld [vmem:[#allocation7 + $0x250] sm:$0xff]
    %v358 = vld [vmem:[#allocation7 + $0x258] sm:$0xff]
    %v359 = vld [vmem:[#allocation7 + $0x260] sm:$0xff]
    %v360 = vld [vmem:[#allocation7 + $0x268] sm:$0xff]
    %v361 = vld [vmem:[#allocation7 + $0x270] sm:$0xff]
    %v362 = vld [vmem:[#allocation7 + $0x278] sm:$0xff]
    %v363 = vld [vmem:[#allocation7 + $0x280] sm:$0xff]
    %v364 = vld [vmem:[#allocation7 + $0x288] sm:$0xff]
    %v365 = vld [vmem:[#allocation7 + $0x290] sm:$0xff]
    %v366 = vld [vmem:[#allocation7 + $0x298] sm:$0xff]
    %v367 = vld [vmem:[#allocation7 + $0x2a0] sm:$0xff]
    %v368 = vld [vmem:[#allocation7 + $0x2a8] sm:$0xff]
    %v369 = vld [vmem:[#allocation7 + $0x2b0] sm:$0xff]
    %v370 = vld [vmem:[#allocation7 + $0x2b8] sm:$0xff]
    %v371 = vld [vmem:[#allocation7 + $0x2c0] sm:$0xff]
    %v372 = vld [vmem:[#allocation7 + $0x2c8] sm:$0xff]
    %v373 = vld [vmem:[#allocation7 + $0x2d0] sm:$0xff]
    %v374 = vld [vmem:[#allocation7 + $0x2d8] sm:$0xff]
    %v375 = vld [vmem:[#allocation7 + $0x2e0] sm:$0xff]
    %v376 = vld [vmem:[#allocation7 + $0x2e8] sm:$0xff]
    %v377 = vld [vmem:[#allocation7 + $0x2f0] sm:$0xff]
    %v378 = vld [vmem:[#allocation7 + $0x2f8] sm:$0xff]
    %v379 = vld [vmem:[%s11] sm:$0x1]
    %v381 = vlaneseq
    %v382 = vshrl.u32 %v381, 7
    %v383 = vsub.s32 0, %v382
    %v384 = vrot.slane %v379, %v383
    %386 = vmatprep.subr.mxu0 0.0
    %387 = vmatpush1.msra.mxu0 %v283
    %388 = vmatprep.subr.mxu0 0.0
    %389 = vmatpush1.msra.mxu0 %v284
    %390 = vmatprep.subr.mxu0 0.0
    %391 = vmatpush1.msra.mxu0 %v285
    %392 = vmatprep.subr.mxu0 0.0
    %393 = vmatpush1.msra.mxu0 %v286
    %394 = vmatprep.subr.mxu0 0.0
    %395 = vmatpush1.msra.mxu0 %v287
    %396 = vmatprep.subr.mxu0 0.0
    %397 = vmatpush1.msra.mxu0 %v288
    %398 = vmatprep.subr.mxu0 0.0
    %399 = vmatpush1.msra.mxu0 %v289
    %400 = vmatprep.subr.mxu0 0.0
    %401 = vmatpush1.msra.mxu0 %v290
    %402 = vmatprep.subr.mxu0 0.0
    %403 = vmatpush1.msra.mxu0 %v291
    %404 = vmatprep.subr.mxu0 0.0
    %405 = vmatpush1.msra.mxu0 %v292
    %406 = vmatprep.subr.mxu0 0.0
    %407 = vmatpush1.msra.mxu0 %v293
    %408 = vmatprep.subr.mxu0 0.0
    %409 = vmatpush1.msra.mxu0 %v294
    %410 = vmatprep.subr.mxu0 0.0
    %411 = vmatpush1.msra.mxu0 %v295
    %412 = vmatprep.subr.mxu0 0.0
    %413 = vmatpush1.msra.mxu0 %v296
    %414 = vmatprep.subr.mxu0 0.0
    %415 = vmatpush1.msra.mxu0 %v297
    %416 = vmatprep.subr.mxu0 0.0
    %417 = vmatpush1.msra.mxu0 %v298
    %418 = vmatprep.subr.mxu0 0.0
    %419 = vmatpush1.msra.mxu0 %v299
    %420 = vmatprep.subr.mxu0 0.0
    %421 = vmatpush1.msra.mxu0 %v300
    %422 = vmatprep.subr.mxu0 0.0
    %423 = vmatpush1.msra.mxu0 %v301
    %424 = vmatprep.subr.mxu0 0.0
    %425 = vmatpush1.msra.mxu0 %v302
    %426 = vmatprep.subr.mxu0 0.0
    %427 = vmatpush1.msra.mxu0 %v303
    %428 = vmatprep.subr.mxu0 0.0
    %429 = vmatpush1.msra.mxu0 %v304
    %430 = vmatprep.subr.mxu0 0.0
    %431 = vmatpush1.msra.mxu0 %v305
    %432 = vmatprep.subr.mxu0 0.0
    %433 = vmatpush1.msra.mxu0 %v306
    %434 = vmatprep.subr.mxu0 0.0
    %435 = vmatpush1.msra.mxu0 %v307
    %436 = vmatprep.subr.mxu0 0.0
    %437 = vmatpush1.msra.mxu0 %v308
    %438 = vmatprep.subr.mxu0 0.0
    %439 = vmatpush1.msra.mxu0 %v309
    %440 = vmatprep.subr.mxu0 0.0
    %441 = vmatpush1.msra.mxu0 %v310
    %442 = vmatprep.subr.mxu0 0.0
    %443 = vmatpush1.msra.mxu0 %v311
    %444 = vmatprep.subr.mxu0 0.0
    %445 = vmatpush1.msra.mxu0 %v312
    %446 = vmatprep.subr.mxu0 0.0
    %447 = vmatpush1.msra.mxu0 %v313
    %448 = vmatprep.subr.mxu0 0.0
    %449 = vmatpush1.msra.mxu0 %v314
    %450 = vmatprep.mubr.f32.mxu0 %v277
    %451 = vmatmul.mubr.f32.gmra.mrb[0].mxu0 %v276
    %v452 = vpop.f32.mrb[0].mxu0
    %v453 = vadd.f32 %v384, %v452
    %v454 = vpop.f32.mrb[0].mxu0
    %455 = vdwg.mxu0
    %456 = vmatprep.subr.mxu0 0.0
    %457 = vmatpush1.msra.mxu0 %v315
    %458 = vmatprep.subr.mxu0 0.0
    %459 = vmatpush1.msra.mxu0 %v316
    %460 = vmatprep.subr.mxu0 0.0
    %461 = vmatpush1.msra.mxu0 %v317
    %462 = vmatprep.subr.mxu0 0.0
    %463 = vmatpush1.msra.mxu0 %v318
    %464 = vmatprep.subr.mxu0 0.0
    %465 = vmatpush1.msra.mxu0 %v319
    %466 = vmatprep.subr.mxu0 0.0
    %467 = vmatpush1.msra.mxu0 %v320
    %468 = vmatprep.subr.mxu0 0.0
    %469 = vmatpush1.msra.mxu0 %v321
    %470 = vmatprep.subr.mxu0 0.0
    %471 = vmatpush1.msra.mxu0 %v322
    %472 = vmatprep.subr.mxu0 0.0
    %473 = vmatpush1.msra.mxu0 %v323
    %474 = vmatprep.subr.mxu0 0.0
    %475 = vmatpush1.msra.mxu0 %v324
    %476 = vmatprep.subr.mxu0 0.0
    %477 = vmatpush1.msra.mxu0 %v325
    %478 = vmatprep.subr.mxu0 0.0
    %479 = vmatpush1.msra.mxu0 %v326
    %480 = vmatprep.subr.mxu0 0.0
    %481 = vmatpush1.msra.mxu0 %v327
    %482 = vmatprep.subr.mxu0 0.0
    %483 = vmatpush1.msra.mxu0 %v328
    %484 = vmatprep.subr.mxu0 0.0
    %485 = vmatpush1.msra.mxu0 %v329
    %486 = vmatprep.subr.mxu0 0.0
    %487 = vmatpush1.msra.mxu0 %v330
    %488 = vmatprep.subr.mxu0 0.0
    %489 = vmatpush1.msra.mxu0 %v331
    %490 = vmatprep.subr.mxu0 0.0
    %491 = vmatpush1.msra.mxu0 %v332
    %492 = vmatprep.subr.mxu0 0.0
    %493 = vmatpush1.msra.mxu0 %v333
    %494 = vmatprep.subr.mxu0 0.0
    %495 = vmatpush1.msra.mxu0 %v334
    %496 = vmatprep.subr.mxu0 0.0
    %497 = vmatpush1.msra.mxu0 %v335
    %498 = vmatprep.subr.mxu0 0.0
    %499 = vmatpush1.msra.mxu0 %v336
    %500 = vmatprep.subr.mxu0 0.0
    %501 = vmatpush1.msra.mxu0 %v337
    %502 = vmatprep.subr.mxu0 0.0
    %503 = vmatpush1.msra.mxu0 %v338
    %504 = vmatprep.subr.mxu0 0.0
    %505 = vmatpush1.msra.mxu0 %v339
    %506 = vmatprep.subr.mxu0 0.0
    %507 = vmatpush1.msra.mxu0 %v340
    %508 = vmatprep.subr.mxu0 0.0
    %509 = vmatpush1.msra.mxu0 %v341
    %510 = vmatprep.subr.mxu0 0.0
    %511 = vmatpush1.msra.mxu0 %v342
    %512 = vmatprep.subr.mxu0 0.0
    %513 = vmatpush1.msra.mxu0 %v343
    %514 = vmatprep.subr.mxu0 0.0
    %515 = vmatpush1.msra.mxu0 %v344
    %516 = vmatprep.subr.mxu0 0.0
    %517 = vmatpush1.msra.mxu0 %v345
    %518 = vmatprep.subr.mxu0 0.0
    %519 = vmatpush1.msra.mxu0 %v346
    %520 = vmatprep.mubr.f32.mxu0 %v279
    %521 = vmatmul.mubr.f32.gmra.mrb[0].mxu0 %v278
    %v522 = vpop.f32.mrb[0].mxu0
    %v523 = vadd.f32 %v453, %v522
    %v524 = vpop.f32.mrb[0].mxu0
    %525 = vdwg.mxu0
    %526 = vmatprep.subr.mxu0 0.0
    %527 = vmatpush1.msra.mxu0 %v347
    %528 = vmatprep.subr.mxu0 0.0
    %529 = vmatpush1.msra.mxu0 %v348
    %530 = vmatprep.subr.mxu0 0.0
    %531 = vmatpush1.msra.mxu0 %v349
    %532 = vmatprep.subr.mxu0 0.0
    %533 = vmatpush1.msra.mxu0 %v350
    %534 = vmatprep.subr.mxu0 0.0
    %535 = vmatpush1.msra.mxu0 %v351
    %536 = vmatprep.subr.mxu0 0.0
    %537 = vmatpush1.msra.mxu0 %v352
    %538 = vmatprep.subr.mxu0 0.0
    %539 = vmatpush1.msra.mxu0 %v353
    %540 = vmatprep.subr.mxu0 0.0
    %541 = vmatpush1.msra.mxu0 %v354
    %542 = vmatprep.subr.mxu0 0.0
    %543 = vmatpush1.msra.mxu0 %v355
    %544 = vmatprep.subr.mxu0 0.0
    %545 = vmatpush1.msra.mxu0 %v356
    %546 = vmatprep.subr.mxu0 0.0
    %547 = vmatpush1.msra.mxu0 %v357
    %548 = vmatprep.subr.mxu0 0.0
    %549 = vmatpush1.msra.mxu0 %v358
    %550 = vmatprep.subr.mxu0 0.0
    %551 = vmatpush1.msra.mxu0 %v359
    %552 = vmatprep.subr.mxu0 0.0
    %553 = vmatpush1.msra.mxu0 %v360
    %554 = vmatprep.subr.mxu0 0.0
    %555 = vmatpush1.msra.mxu0 %v361
    %556 = vmatprep.subr.mxu0 0.0
    %557 = vmatpush1.msra.mxu0 %v362
    %558 = vmatprep.subr.mxu0 0.0
    %559 = vmatpush1.msra.mxu0 %v363
    %560 = vmatprep.subr.mxu0 0.0
    %561 = vmatpush1.msra.mxu0 %v364
    %562 = vmatprep.subr.mxu0 0.0
    %563 = vmatpush1.msra.mxu0 %v365
    %564 = vmatprep.subr.mxu0 0.0
    %565 = vmatpush1.msra.mxu0 %v366
    %566 = vmatprep.subr.mxu0 0.0
    %567 = vmatpush1.msra.mxu0 %v367
    %568 = vmatprep.subr.mxu0 0.0
    %569 = vmatpush1.msra.mxu0 %v368
    %570 = vmatprep.subr.mxu0 0.0
    %571 = vmatpush1.msra.mxu0 %v369
    %572 = vmatprep.subr.mxu0 0.0
    %573 = vmatpush1.msra.mxu0 %v370
    %574 = vmatprep.subr.mxu0 0.0
    %575 = vmatpush1.msra.mxu0 %v371
    %576 = vmatprep.subr.mxu0 0.0
    %577 = vmatpush1.msra.mxu0 %v372
    %578 = vmatprep.subr.mxu0 0.0
    %579 = vmatpush1.msra.mxu0 %v373
    %580 = vmatprep.subr.mxu0 0.0
    %581 = vmatpush1.msra.mxu0 %v374
    %582 = vmatprep.subr.mxu0 0.0
    %583 = vmatpush1.msra.mxu0 %v375
    %584 = vmatprep.subr.mxu0 0.0
    %585 = vmatpush1.msra.mxu0 %v376
    %586 = vmatprep.subr.mxu0 0.0
    %587 = vmatpush1.msra.mxu0 %v377
    %588 = vmatprep.subr.mxu0 0.0
    %589 = vmatpush1.msra.mxu0 %v378
    %590 = vmatprep.mubr.f32.mxu0 %v281
    %591 = vmatmul.mubr.f32.gmra.mrb[0].mxu0 %v280
    %v592 = vpop.f32.mrb[0].mxu0
    %v593 = vadd.f32 %v523, %v592
    %v594 = vpop.f32.mrb[0].mxu0
    %595 = vdwg.mxu0
    %v596 = vxor.u32 %v593, 2147483648
    %v597 = vmul.f32 %v596, 1.442695
    %v598 = vpow.pop %v597
    %v599 = vadd.f32 %v598, 1.0
    %v600 = vrcp.pop %v599
    %v601 = vmul.f32 1.0, %v600
    %v602 = vmul.f32 %v593, %v601
    %v603 = vld [vmem:[#allocation8] sm:$0xff]
    %v604 = vld [vmem:[#allocation8 + $0x8] sm:$0xff]
    %v605 = vld [vmem:[#allocation8 + $0x10] sm:$0xff]
    %v606 = vld [vmem:[#allocation8 + $0x18] sm:$0xff]
    %v607 = vld [vmem:[#allocation8 + $0x20] sm:$0xff]
    %v608 = vld [vmem:[#allocation8 + $0x28] sm:$0xff]
    %v609 = vld [vmem:[#allocation8 + $0x30] sm:$0xff]
    %v610 = vld [vmem:[#allocation8 + $0x38] sm:$0xff]
    %v611 = vld [vmem:[#allocation8 + $0x40] sm:$0xff]
    %v612 = vld [vmem:[#allocation8 + $0x48] sm:$0xff]
    %v613 = vld [vmem:[#allocation8 + $0x50] sm:$0xff]
    %v614 = vld [vmem:[#allocation8 + $0x58] sm:$0xff]
    %v615 = vld [vmem:[#allocation8 + $0x60] sm:$0xff]
    %v616 = vld [vmem:[#allocation8 + $0x68] sm:$0xff]
    %v617 = vld [vmem:[#allocation8 + $0x70] sm:$0xff]
    %v618 = vld [vmem:[#allocation8 + $0x78] sm:$0xff]
    %v619 = vld [vmem:[%s15] sm:$0x1]
    %v621 = vlaneseq
    %v622 = vshrl.u32 %v621, 7
    %v623 = vsub.s32 0, %v622
    %v624 = vrot.slane %v619, %v623
    %626 = vmatprep.subr.mxu0 0.0
    %627 = vmatpush1.msra.mxu0 %v603
    %628 = vmatprep.subr.mxu0 0.0
    %629 = vmatpush1.msra.mxu0 %v604
    %630 = vmatprep.subr.mxu0 0.0
    %631 = vmatpush1.msra.mxu0 %v605
    %632 = vmatprep.subr.mxu0 0.0
    %633 = vmatpush1.msra.mxu0 %v606
    %634 = vmatprep.subr.mxu0 0.0
    %635 = vmatpush1.msra.mxu0 %v607
    %636 = vmatprep.subr.mxu0 0.0
    %637 = vmatpush1.msra.mxu0 %v608
    %638 = vmatprep.subr.mxu0 0.0
    %639 = vmatpush1.msra.mxu0 %v609
    %640 = vmatprep.subr.mxu0 0.0
    %641 = vmatpush1.msra.mxu0 %v610
    %642 = vmatprep.subr.mxu0 0.0
    %643 = vmatpush1.msra.mxu0 %v611
    %644 = vmatprep.subr.mxu0 0.0
    %645 = vmatpush1.msra.mxu0 %v612
    %646 = vmatprep.subr.mxu0 0.0
    %647 = vmatpush1.msra.mxu0 %v613
    %648 = vmatprep.subr.mxu0 0.0
    %649 = vmatpush1.msra.mxu0 %v614
    %650 = vmatprep.subr.mxu0 0.0
    %651 = vmatpush1.msra.mxu0 %v615
    %652 = vmatprep.subr.mxu0 0.0
    %653 = vmatpush1.msra.mxu0 %v616
    %654 = vmatprep.subr.mxu0 0.0
    %655 = vmatpush1.msra.mxu0 %v617
    %656 = vmatprep.subr.mxu0 0.0
    %657 = vmatpush1.msra.mxu0 %v618
    %658 = vmatprep.subr.mxu0 0.0
    %659 = vmatpush1.msra.mxu0 0.0
    %660 = vmatprep.subr.mxu0 0.0
    %661 = vmatpush1.msra.mxu0 0.0
    %662 = vmatprep.subr.mxu0 0.0
    %663 = vmatpush1.msra.mxu0 0.0
    %664 = vmatprep.subr.mxu0 0.0
    %665 = vmatpush1.msra.mxu0 0.0
    %666 = vmatprep.subr.mxu0 0.0
    %667 = vmatpush1.msra.mxu0 0.0
    %668 = vmatprep.subr.mxu0 0.0
    %669 = vmatpush1.msra.mxu0 0.0
    %670 = vmatprep.subr.mxu0 0.0
    %671 = vmatpush1.msra.mxu0 0.0
    %672 = vmatprep.subr.mxu0 0.0
    %673 = vmatpush1.msra.mxu0 0.0
    %674 = vmatprep.subr.mxu0 0.0
    %675 = vmatpush1.msra.mxu0 0.0
    %676 = vmatprep.subr.mxu0 0.0
    %677 = vmatpush1.msra.mxu0 0.0
    %678 = vmatprep.subr.mxu0 0.0
    %679 = vmatpush1.msra.mxu0 0.0
    %680 = vmatprep.subr.mxu0 0.0
    %681 = vmatpush1.msra.mxu0 0.0
    %682 = vmatprep.subr.mxu0 0.0
    %683 = vmatpush1.msra.mxu0 0.0
    %684 = vmatprep.subr.mxu0 0.0
    %685 = vmatpush1.msra.mxu0 0.0
    %686 = vmatprep.subr.mxu0 0.0
    %687 = vmatpush1.msra.mxu0 0.0
    %688 = vmatprep.subr.mxu0 0.0
    %689 = vmatpush1.msra.mxu0 0.0
    %690 = vmatprep.mubr.f32.mxu0 0.0
    %691 = vmatmul.mubr.f32.gmra.mrb[0].mxu0 %v602
    %v692 = vpop.f32.mrb[0].mxu0
    %v693 = vadd.f32 %v624, %v692
    %v694 = vpop.f32.mrb[0].mxu0
    %695 = vdwg.mxu0
    %v696 = vxor.u32 %v693, 2147483648
    %v697 = vmul.f32 %v696, 1.442695
    %v698 = vpow.pop %v697
    %v699 = vadd.f32 %v698, 1.0
    %v700 = vrcp.pop %v699
    %v701 = vmul.f32 1.0, %v700
    %v702 = vmul.f32 %v693, %v701
    %v703 = vld [vmem:[#allocation10] sm:$0xff]
    %v704 = vld [vmem:[#allocation10 + $0x8] sm:$0xff]
    %v705 = vld [vmem:[#allocation10 + $0x10] sm:$0xff]
    %v706 = vld [vmem:[#allocation10 + $0x18] sm:$0xff]
    %v707 = vld [vmem:[#allocation10 + $0x20] sm:$0xff]
    %v708 = vld [vmem:[#allocation10 + $0x28] sm:$0xff]
    %v709 = vld [vmem:[#allocation10 + $0x30] sm:$0xff]
    %v710 = vld [vmem:[#allocation10 + $0x38] sm:$0xff]
    %v711 = vld [vmem:[#allocation10 + $0x40] sm:$0xff]
    %v712 = vld [vmem:[#allocation10 + $0x48] sm:$0xff]
    %v713 = vld [vmem:[#allocation10 + $0x50] sm:$0xff]
    %v714 = vld [vmem:[#allocation10 + $0x58] sm:$0xff]
    %v715 = vld [vmem:[#allocation10 + $0x60] sm:$0xff]
    %v716 = vld [vmem:[#allocation10 + $0x68] sm:$0xff]
    %v717 = vld [vmem:[#allocation10 + $0x70] sm:$0xff]
    %v718 = vld [vmem:[#allocation10 + $0x78] sm:$0xff]
    %v719 = vld [vmem:[%s19] sm:$0x1]
    %v721 = vlaneseq
    %v722 = vshrl.u32 %v721, 7
    %v723 = vsub.s32 0, %v722
    %v724 = vrot.slane %v719, %v723
    %726 = vmatprep.subr.mxu0 0.0
    %727 = vmatpush1.msra.mxu0 %v703
    %728 = vmatprep.subr.mxu0 0.0
    %729 = vmatpush1.msra.mxu0 %v704
    %730 = vmatprep.subr.mxu0 0.0
    %731 = vmatpush1.msra.mxu0 %v705
    %732 = vmatprep.subr.mxu0 0.0
    %733 = vmatpush1.msra.mxu0 %v706
    %734 = vmatprep.subr.mxu0 0.0
    %735 = vmatpush1.msra.mxu0 %v707
    %736 = vmatprep.subr.mxu0 0.0
    %737 = vmatpush1.msra.mxu0 %v708
    %738 = vmatprep.subr.mxu0 0.0
    %739 = vmatpush1.msra.mxu0 %v709
    %740 = vmatprep.subr.mxu0 0.0
    %741 = vmatpush1.msra.mxu0 %v710
    %742 = vmatprep.subr.mxu0 0.0
    %743 = vmatpush1.msra.mxu0 %v711
    %744 = vmatprep.subr.mxu0 0.0
    %745 = vmatpush1.msra.mxu0 %v712
    %746 = vmatprep.subr.mxu0 0.0
    %747 = vmatpush1.msra.mxu0 %v713
    %748 = vmatprep.subr.mxu0 0.0
    %749 = vmatpush1.msra.mxu0 %v714
    %750 = vmatprep.subr.mxu0 0.0
    %751 = vmatpush1.msra.mxu0 %v715
    %752 = vmatprep.subr.mxu0 0.0
    %753 = vmatpush1.msra.mxu0 %v716
    %754 = vmatprep.subr.mxu0 0.0
    %755 = vmatpush1.msra.mxu0 %v717
    %756 = vmatprep.subr.mxu0 0.0
    %757 = vmatpush1.msra.mxu0 %v718
    %758 = vmatprep.subr.mxu0 0.0
    %759 = vmatpush1.msra.mxu0 0.0
    %760 = vmatprep.subr.mxu0 0.0
    %761 = vmatpush1.msra.mxu0 0.0
    %762 = vmatprep.subr.mxu0 0.0
    %763 = vmatpush1.msra.mxu0 0.0
    %764 = vmatprep.subr.mxu0 0.0
    %765 = vmatpush1.msra.mxu0 0.0
    %766 = vmatprep.subr.mxu0 0.0
    %767 = vmatpush1.msra.mxu0 0.0
    %768 = vmatprep.subr.mxu0 0.0
    %769 = vmatpush1.msra.mxu0 0.0
    %770 = vmatprep.subr.mxu0 0.0
    %771 = vmatpush1.msra.mxu0 0.0
    %772 = vmatprep.subr.mxu0 0.0
    %773 = vmatpush1.msra.mxu0 0.0
    %774 = vmatprep.subr.mxu0 0.0
    %775 = vmatpush1.msra.mxu0 0.0
    %776 = vmatprep.subr.mxu0 0.0
    %777 = vmatpush1.msra.mxu0 0.0
    %778 = vmatprep.subr.mxu0 0.0
    %779 = vmatpush1.msra.mxu0 0.0
    %780 = vmatprep.subr.mxu0 0.0
    %781 = vmatpush1.msra.mxu0 0.0
    %782 = vmatprep.subr.mxu0 0.0
    %783 = vmatpush1.msra.mxu0 0.0
    %784 = vmatprep.subr.mxu0 0.0
    %785 = vmatpush1.msra.mxu0 0.0
    %786 = vmatprep.subr.mxu0 0.0
    %787 = vmatpush1.msra.mxu0 0.0
    %788 = vmatprep.subr.mxu0 0.0
    %789 = vmatpush1.msra.mxu0 0.0
    %790 = vmatprep.mubr.f32.mxu0 0.0
    %791 = vmatmul.mubr.f32.gmra.mrb[0].mxu0 %v702
    %v792 = vpop.f32.mrb[0].mxu0
    %v793 = vadd.f32 %v724, %v792
    %v794 = vpop.f32.mrb[0].mxu0
    %795 = vdwg.mxu0
    %v796 = vxor.u32 %v793, 2147483648
    %v797 = vmul.f32 %v796, 1.442695
    %v798 = vpow.pop %v797
    %v799 = vadd.f32 %v798, 1.0
    %v800 = vrcp.pop %v799
    %v801 = vmul.f32 1.0, %v800
    %v802 = vmul.f32 %v793, %v801
    %v803 = vld [vmem:[#allocation11] sm:$0xff]
    %v804 = vld [vmem:[#allocation11 + $0x8] sm:$0xff]
    %v805 = vld [vmem:[#allocation11 + $0x10] sm:$0xff]
    %v806 = vld [vmem:[#allocation11 + $0x18] sm:$0xff]
    %v807 = vld [vmem:[#allocation11 + $0x20] sm:$0xff]
    %v808 = vld [vmem:[#allocation11 + $0x28] sm:$0xff]
    %v809 = vld [vmem:[#allocation11 + $0x30] sm:$0xff]
    %v810 = vld [vmem:[#allocation11 + $0x38] sm:$0xff]
    %v811 = vld [vmem:[#allocation11 + $0x40] sm:$0xff]
    %v812 = vld [vmem:[#allocation11 + $0x48] sm:$0xff]
    %v813 = vld [vmem:[#allocation11 + $0x50] sm:$0xff]
    %v814 = vld [vmem:[#allocation11 + $0x58] sm:$0xff]
    %v815 = vld [vmem:[#allocation11 + $0x60] sm:$0xff]
    %v816 = vld [vmem:[#allocation11 + $0x68] sm:$0xff]
    %v817 = vld [vmem:[#allocation11 + $0x70] sm:$0xff]
    %v818 = vld [vmem:[#allocation11 + $0x78] sm:$0xff]
    %v819 = vld [vmem:[%s23] sm:$0x1]
    %v821 = vlaneseq
    %v822 = vshrl.u32 %v821, 7
    %v823 = vsub.s32 0, %v822
    %v824 = vrot.slane %v819, %v823
    %826 = vmatprep.subr.mxu0 0.0
    %827 = vmatpush1.msra.mxu0 %v803
    %828 = vmatprep.subr.mxu0 0.0
    %829 = vmatpush1.msra.mxu0 %v804
    %830 = vmatprep.subr.mxu0 0.0
    %831 = vmatpush1.msra.mxu0 %v805
    %832 = vmatprep.subr.mxu0 0.0
    %833 = vmatpush1.msra.mxu0 %v806
    %834 = vmatprep.subr.mxu0 0.0
    %835 = vmatpush1.msra.mxu0 %v807
    %836 = vmatprep.subr.mxu0 0.0
    %837 = vmatpush1.msra.mxu0 %v808
    %838 = vmatprep.subr.mxu0 0.0
    %839 = vmatpush1.msra.mxu0 %v809
    %840 = vmatprep.subr.mxu0 0.0
    %841 = vmatpush1.msra.mxu0 %v810
    %842 = vmatprep.subr.mxu0 0.0
    %843 = vmatpush1.msra.mxu0 %v811
    %844 = vmatprep.subr.mxu0 0.0
    %845 = vmatpush1.msra.mxu0 %v812
    %846 = vmatprep.subr.mxu0 0.0
    %847 = vmatpush1.msra.mxu0 %v813
    %848 = vmatprep.subr.mxu0 0.0
    %849 = vmatpush1.msra.mxu0 %v814
    %850 = vmatprep.subr.mxu0 0.0
    %851 = vmatpush1.msra.mxu0 %v815
    %852 = vmatprep.subr.mxu0 0.0
    %853 = vmatpush1.msra.mxu0 %v816
    %854 = vmatprep.subr.mxu0 0.0
    %855 = vmatpush1.msra.mxu0 %v817
    %856 = vmatprep.subr.mxu0 0.0
    %857 = vmatpush1.msra.mxu0 %v818
    %858 = vmatprep.subr.mxu0 0.0
    %859 = vmatpush1.msra.mxu0 0.0
    %860 = vmatprep.subr.mxu0 0.0
    %861 = vmatpush1.msra.mxu0 0.0
    %862 = vmatprep.subr.mxu0 0.0
    %863 = vmatpush1.msra.mxu0 0.0
    %864 = vmatprep.subr.mxu0 0.0
    %865 = vmatpush1.msra.mxu0 0.0
    %866 = vmatprep.subr.mxu0 0.0
    %867 = vmatpush1.msra.mxu0 0.0
    %868 = vmatprep.subr.mxu0 0.0
    %869 = vmatpush1.msra.mxu0 0.0
    %870 = vmatprep.subr.mxu0 0.0
    %871 = vmatpush1.msra.mxu0 0.0
    %872 = vmatprep.subr.mxu0 0.0
    %873 = vmatpush1.msra.mxu0 0.0
    %874 = vmatprep.subr.mxu0 0.0
    %875 = vmatpush1.msra.mxu0 0.0
    %876 = vmatprep.subr.mxu0 0.0
    %877 = vmatpush1.msra.mxu0 0.0
    %878 = vmatprep.subr.mxu0 0.0
    %879 = vmatpush1.msra.mxu0 0.0
    %880 = vmatprep.subr.mxu0 0.0
    %881 = vmatpush1.msra.mxu0 0.0
    %882 = vmatprep.subr.mxu0 0.0
    %883 = vmatpush1.msra.mxu0 0.0
    %884 = vmatprep.subr.mxu0 0.0
    %885 = vmatpush1.msra.mxu0 0.0
    %886 = vmatprep.subr.mxu0 0.0
    %887 = vmatpush1.msra.mxu0 0.0
    %888 = vmatprep.subr.mxu0 0.0
    %889 = vmatpush1.msra.mxu0 0.0
    %890 = vmatprep.mubr.f32.mxu0 0.0
    %891 = vmatmul.mubr.f32.gmra.mrb[0].mxu0 %v802
    %v892 = vpop.f32.mrb[0].mxu0
    %v893 = vadd.f32 %v824, %v892
    %v894 = vpop.f32.mrb[0].mxu0
    %895 = vdwg.mxu0
    %v896 = vxor.u32 %v893, 2147483648
    %v897 = vmul.f32 %v896, 1.442695
    %v898 = vpow.pop %v897
    %v899 = vadd.f32 %v898, 1.0
    %v900 = vrcp.pop %v899
    %v901 = vmul.f32 1.0, %v900
    %v902 = vmul.f32 %v893, %v901
    %v903 = vld [vmem:[#allocation13] sm:$0xff]
    %v904 = vld [vmem:[#allocation13 + $0x8] sm:$0xff]
    %v905 = vld [vmem:[#allocation13 + $0x10] sm:$0xff]
    %v906 = vld [vmem:[#allocation13 + $0x18] sm:$0xff]
    %v907 = vld [vmem:[#allocation13 + $0x20] sm:$0xff]
    %v908 = vld [vmem:[#allocation13 + $0x28] sm:$0xff]
    %v909 = vld [vmem:[#allocation13 + $0x30] sm:$0xff]
    %v910 = vld [vmem:[#allocation13 + $0x38] sm:$0xff]
    %v911 = vld [vmem:[#allocation13 + $0x40] sm:$0xff]
    %v912 = vld [vmem:[#allocation13 + $0x48] sm:$0xff]
    %v913 = vld [vmem:[#allocation13 + $0x50] sm:$0xff]
    %v914 = vld [vmem:[#allocation13 + $0x58] sm:$0xff]
    %v915 = vld [vmem:[#allocation13 + $0x60] sm:$0xff]
    %v916 = vld [vmem:[#allocation13 + $0x68] sm:$0xff]
    %v917 = vld [vmem:[#allocation13 + $0x70] sm:$0xff]
    %v918 = vld [vmem:[#allocation13 + $0x78] sm:$0xff]
    %v919 = vld [vmem:[#allocation13 + $0x80] sm:$0xff]
    %v920 = vld [vmem:[#allocation13 + $0x88] sm:$0xff]
    %v921 = vld [vmem:[#allocation13 + $0x90] sm:$0xff]
    %v922 = vld [vmem:[#allocation13 + $0x98] sm:$0xff]
    %v923 = vld [vmem:[#allocation13 + $0xa0] sm:$0xff]
    %v924 = vld [vmem:[#allocation13 + $0xa8] sm:$0xff]
    %v925 = vld [vmem:[#allocation13 + $0xb0] sm:$0xff]
    %v926 = vld [vmem:[#allocation13 + $0xb8] sm:$0xff]
    %v927 = vld [vmem:[#allocation13 + $0xc0] sm:$0xff]
    %v928 = vld [vmem:[#allocation13 + $0xc8] sm:$0xff]
    %v929 = vld [vmem:[#allocation13 + $0xd0] sm:$0xff]
    %v930 = vld [vmem:[#allocation13 + $0xd8] sm:$0xff]
    %v931 = vld [vmem:[#allocation13 + $0xe0] sm:$0xff]
    %v932 = vld [vmem:[#allocation13 + $0xe8] sm:$0xff]
    %v933 = vld [vmem:[#allocation13 + $0xf0] sm:$0xff]
    %v934 = vld [vmem:[#allocation13 + $0xf8] sm:$0xff]
    %v935 = vld [vmem:[%s27] sm:$0x3]
    %v937 = vlaneseq
    %v938 = vshrl.u32 %v937, 7
    %v939 = vsub.s32 0, %v938
    %v940 = vrot.slane %v935, %v939
    %v941 = vlaneseq
    %v942 = vshrl.u32 %v941, 7
    %v943 = vsub.s32 1, %v942
    %v944 = vrot.slane %v935, %v943
    %947 = vmatprep.subr.mxu0 %v904
    %948 = vmatpush1.msra.mxu0 %v903
    %949 = vmatprep.subr.mxu0 %v906
    %950 = vmatpush1.msra.mxu0 %v905
    %951 = vmatprep.subr.mxu0 %v908
    %952 = vmatpush1.msra.mxu0 %v907
    %953 = vmatprep.subr.mxu0 %v910
    %954 = vmatpush1.msra.mxu0 %v909
    %955 = vmatprep.subr.mxu0 %v912
    %956 = vmatpush1.msra.mxu0 %v911
    %957 = vmatprep.subr.mxu0 %v914
    %958 = vmatpush1.msra.mxu0 %v913
    %959 = vmatprep.subr.mxu0 %v916
    %960 = vmatpush1.msra.mxu0 %v915
    %961 = vmatprep.subr.mxu0 %v918
    %962 = vmatpush1.msra.mxu0 %v917
    %963 = vmatprep.subr.mxu0 %v920
    %964 = vmatpush1.msra.mxu0 %v919
    %965 = vmatprep.subr.mxu0 %v922
    %966 = vmatpush1.msra.mxu0 %v921
    %967 = vmatprep.subr.mxu0 %v924
    %968 = vmatpush1.msra.mxu0 %v923
    %969 = vmatprep.subr.mxu0 %v926
    %970 = vmatpush1.msra.mxu0 %v925
    %971 = vmatprep.subr.mxu0 %v928
    %972 = vmatpush1.msra.mxu0 %v927
    %973 = vmatprep.subr.mxu0 %v930
    %974 = vmatpush1.msra.mxu0 %v929
    %975 = vmatprep.subr.mxu0 %v932
    %976 = vmatpush1.msra.mxu0 %v931
    %977 = vmatprep.subr.mxu0 %v934
    %978 = vmatpush1.msra.mxu0 %v933
    %979 = vmatprep.subr.mxu0 0.0
    %980 = vmatpush1.msra.mxu0 0.0
    %981 = vmatprep.subr.mxu0 0.0
    %982 = vmatpush1.msra.mxu0 0.0
    %983 = vmatprep.subr.mxu0 0.0
    %984 = vmatpush1.msra.mxu0 0.0
    %985 = vmatprep.subr.mxu0 0.0
    %986 = vmatpush1.msra.mxu0 0.0
    %987 = vmatprep.subr.mxu0 0.0
    %988 = vmatpush1.msra.mxu0 0.0
    %989 = vmatprep.subr.mxu0 0.0
    %990 = vmatpush1.msra.mxu0 0.0
    %991 = vmatprep.subr.mxu0 0.0
    %992 = vmatpush1.msra.mxu0 0.0
    %993 = vmatprep.subr.mxu0 0.0
    %994 = vmatpush1.msra.mxu0 0.0
    %995 = vmatprep.subr.mxu0 0.0
    %996 = vmatpush1.msra.mxu0 0.0
    %997 = vmatprep.subr.mxu0 0.0
    %998 = vmatpush1.msra.mxu0 0.0
    %999 = vmatprep.subr.mxu0 0.0
    %1000 = vmatpush1.msra.mxu0 0.0
    %1001 = vmatprep.subr.mxu0 0.0
    %1002 = vmatpush1.msra.mxu0 0.0
    %1003 = vmatprep.subr.mxu0 0.0
    %1004 = vmatpush1.msra.mxu0 0.0
    %1005 = vmatprep.subr.mxu0 0.0
    %1006 = vmatpush1.msra.mxu0 0.0
    %1007 = vmatprep.subr.mxu0 0.0
    %1008 = vmatpush1.msra.mxu0 0.0
    %1009 = vmatprep.subr.mxu0 0.0
    %1010 = vmatpush1.msra.mxu0 0.0
    %1011 = vmatprep.mubr.f32.mxu0 0.0
    %1012 = vmatmul.mubr.f32.gmra.mrb[0].mxu0 %v902
    %v1013 = vpop.f32.mrb[0].mxu0
    %v1014 = vadd.f32 %v940, %v1013
    %v1015 = vpop.f32.mrb[0].mxu0
    %v1016 = vadd.f32 %v944, %v1015
    %1017 = vdwg.mxu0
    %v1018 = vmax.f32 %v1016, 0.0
    %vm1019 = vcmp.ne.f32.partialorder %v1016, %v1016
    %v1020 = vadd.f32 %v1016, 0.0
    %v1021 = vand.u32 2147483647, %v1016
    %v1022 = vsub.f32 0.0, %v1021
    %v1023 = vmul.f32 %v1022, 1.442695
    %v1024 = vpow.pop %v1023
    %v1025 = vadd.f32 %v1024, 1.0
    %v1026 = vlog2.pop %v1025
    %v1027 = vmul.f32 %v1026, 0.6931472
    %v1028 = vmul.f32 -0.5, %v1024
    %v1029 = vadd.f32 %v1028, 1.0
    %v1030 = vmul.f32 %v1029, %v1024
    %v1031 = vand.u32 2147483647, %v1024
    %vm1032 = vcmp.lt.f32.partialorder %v1031, 0.0004427343
    %v1033 = vsel %vm1032, %v1030, %v1027
    %v1034 = vadd.f32 %v1018, %v1033
    %v1035 = vsel %vm1019, %v1020, %v1034
    %v1036 = vadd.f32 %v1035, 1e-08
    %v1037 = vmul.f32 %v1036, %v282
    %v1038 = vadd.f32 %v1014, %v1037
    %v1039 = vld [vmem:[#allocation14] sm:$0xff]
    %v1040 = vld [vmem:[#allocation14 + $0x8] sm:$0xff]
    %v1041 = vld [vmem:[#allocation14 + $0x10] sm:$0xff]
    %v1042 = vld [vmem:[#allocation14 + $0x18] sm:$0xff]
    %v1043 = vld [vmem:[#allocation14 + $0x20] sm:$0xff]
    %v1044 = vld [vmem:[#allocation14 + $0x28] sm:$0xff]
    %v1045 = vld [vmem:[#allocation14 + $0x30] sm:$0xff]
    %v1046 = vld [vmem:[#allocation14 + $0x38] sm:$0xff]
    %v1047 = vld [vmem:[#allocation14 + $0x40] sm:$0xff]
    %v1048 = vld [vmem:[#allocation14 + $0x48] sm:$0xff]
    %v1049 = vld [vmem:[#allocation14 + $0x50] sm:$0xff]
    %v1050 = vld [vmem:[#allocation14 + $0x58] sm:$0xff]
    %v1051 = vld [vmem:[#allocation14 + $0x60] sm:$0xff]
    %v1052 = vld [vmem:[#allocation14 + $0x68] sm:$0xff]
    %v1053 = vld [vmem:[#allocation14 + $0x70] sm:$0xff]
    %v1054 = vld [vmem:[#allocation14 + $0x78] sm:$0xff]
    %v1055 = vld [vmem:[%s31] sm:$0x1]
    %v1057 = vlaneseq
    %v1058 = vshrl.u32 %v1057, 7
    %v1059 = vsub.s32 0, %v1058
    %v1060 = vrot.slane %v1055, %v1059
    %1062 = vmatprep.subr.mxu0 0.0
    %1063 = vmatpush1.msra.mxu0 %v1039
    %1064 = vmatprep.subr.mxu0 0.0
    %1065 = vmatpush1.msra.mxu0 %v1040
    %1066 = vmatprep.subr.mxu0 0.0
    %1067 = vmatpush1.msra.mxu0 %v1041
    %1068 = vmatprep.subr.mxu0 0.0
    %1069 = vmatpush1.msra.mxu0 %v1042
    %1070 = vmatprep.subr.mxu0 0.0
    %1071 = vmatpush1.msra.mxu0 %v1043
    %1072 = vmatprep.subr.mxu0 0.0
    %1073 = vmatpush1.msra.mxu0 %v1044
    %1074 = vmatprep.subr.mxu0 0.0
    %1075 = vmatpush1.msra.mxu0 %v1045
    %1076 = vmatprep.subr.mxu0 0.0
    %1077 = vmatpush1.msra.mxu0 %v1046
    %1078 = vmatprep.subr.mxu0 0.0
    %1079 = vmatpush1.msra.mxu0 %v1047
    %1080 = vmatprep.subr.mxu0 0.0
    %1081 = vmatpush1.msra.mxu0 %v1048
    %1082 = vmatprep.subr.mxu0 0.0
    %1083 = vmatpush1.msra.mxu0 %v1049
    %1084 = vmatprep.subr.mxu0 0.0
    %1085 = vmatpush1.msra.mxu0 %v1050
    %1086 = vmatprep.subr.mxu0 0.0
    %1087 = vmatpush1.msra.mxu0 %v1051
    %1088 = vmatprep.subr.mxu0 0.0
    %1089 = vmatpush1.msra.mxu0 %v1052
    %1090 = vmatprep.subr.mxu0 0.0
    %1091 = vmatpush1.msra.mxu0 %v1053
    %1092 = vmatprep.subr.mxu0 0.0
    %1093 = vmatpush1.msra.mxu0 %v1054
    %1094 = vmatprep.subr.mxu0 0.0
    %1095 = vmatpush1.msra.mxu0 0.0
    %1096 = vmatprep.subr.mxu0 0.0
    %1097 = vmatpush1.msra.mxu0 0.0
    %1098 = vmatprep.subr.mxu0 0.0
    %1099 = vmatpush1.msra.mxu0 0.0
    %1100 = vmatprep.subr.mxu0 0.0
    %1101 = vmatpush1.msra.mxu0 0.0
    %1102 = vmatprep.subr.mxu0 0.0
    %1103 = vmatpush1.msra.mxu0 0.0
    %1104 = vmatprep.subr.mxu0 0.0
    %1105 = vmatpush1.msra.mxu0 0.0
    %1106 = vmatprep.subr.mxu0 0.0
    %1107 = vmatpush1.msra.mxu0 0.0
    %1108 = vmatprep.subr.mxu0 0.0
    %1109 = vmatpush1.msra.mxu0 0.0
    %1110 = vmatprep.subr.mxu0 0.0
    %1111 = vmatpush1.msra.mxu0 0.0
    %1112 = vmatprep.subr.mxu0 0.0
    %1113 = vmatpush1.msra.mxu0 0.0
    %1114 = vmatprep.subr.mxu0 0.0
    %1115 = vmatpush1.msra.mxu0 0.0
    %1116 = vmatprep.subr.mxu0 0.0
    %1117 = vmatpush1.msra.mxu0 0.0
    %1118 = vmatprep.subr.mxu0 0.0
    %1119 = vmatpush1.msra.mxu0 0.0
    %1120 = vmatprep.subr.mxu0 0.0
    %1121 = vmatpush1.msra.mxu0 0.0
    %1122 = vmatprep.subr.mxu0 0.0
    %1123 = vmatpush1.msra.mxu0 0.0
    %1124 = vmatprep.subr.mxu0 0.0
    %1125 = vmatpush1.msra.mxu0 0.0
    %1126 = vmatprep.mubr.f32.mxu0 0.0
    %1127 = vmatmul.mubr.f32.gmra.mrb[0].mxu0 %v1038
    %v1128 = vpop.f32.mrb[0].mxu0
    %v1129 = vadd.f32 %v1060, %v1128
    %v1130 = vpop.f32.mrb[0].mxu0
    %1131 = vdwg.mxu0
    %v1132 = vxor.u32 %v1129, 2147483648
    %v1133 = vmul.f32 %v1132, 1.442695
    %v1134 = vpow.pop %v1133
    %v1135 = vadd.f32 %v1134, 1.0
    %v1136 = vrcp.pop %v1135
    %v1137 = vmul.f32 1.0, %v1136
    %v1138 = vmul.f32 %v1129, %v1137
    %v1139 = vld [vmem:[#allocation16] sm:$0xff]
    %v1140 = vld [vmem:[#allocation16 + $0x8] sm:$0xff]
    %v1141 = vld [vmem:[#allocation16 + $0x10] sm:$0xff]
    %v1142 = vld [vmem:[#allocation16 + $0x18] sm:$0xff]
    %v1143 = vld [vmem:[#allocation16 + $0x20] sm:$0xff]
    %v1144 = vld [vmem:[#allocation16 + $0x28] sm:$0xff]
    %v1145 = vld [vmem:[#allocation16 + $0x30] sm:$0xff]
    %v1146 = vld [vmem:[#allocation16 + $0x38] sm:$0xff]
    %v1147 = vld [vmem:[#allocation16 + $0x40] sm:$0xff]
    %v1148 = vld [vmem:[#allocation16 + $0x48] sm:$0xff]
    %v1149 = vld [vmem:[#allocation16 + $0x50] sm:$0xff]
    %v1150 = vld [vmem:[#allocation16 + $0x58] sm:$0xff]
    %v1151 = vld [vmem:[#allocation16 + $0x60] sm:$0xff]
    %v1152 = vld [vmem:[#allocation16 + $0x68] sm:$0xff]
    %v1153 = vld [vmem:[#allocation16 + $0x70] sm:$0xff]
    %v1154 = vld [vmem:[#allocation16 + $0x78] sm:$0xff]
    %v1155 = vld [vmem:[%s35] sm:$0x1]
    %v1157 = vlaneseq
    %v1158 = vshrl.u32 %v1157, 7
    %v1159 = vsub.s32 0, %v1158
    %v1160 = vrot.slane %v1155, %v1159
    %1162 = vmatprep.subr.mxu0 0.0
    %1163 = vmatpush1.msra.mxu0 %v1139
    %1164 = vmatprep.subr.mxu0 0.0
    %1165 = vmatpush1.msra.mxu0 %v1140
    %1166 = vmatprep.subr.mxu0 0.0
    %1167 = vmatpush1.msra.mxu0 %v1141
    %1168 = vmatprep.subr.mxu0 0.0
    %1169 = vmatpush1.msra.mxu0 %v1142
    %1170 = vmatprep.subr.mxu0 0.0
    %1171 = vmatpush1.msra.mxu0 %v1143
    %1172 = vmatprep.subr.mxu0 0.0
    %1173 = vmatpush1.msra.mxu0 %v1144
    %1174 = vmatprep.subr.mxu0 0.0
    %1175 = vmatpush1.msra.mxu0 %v1145
    %1176 = vmatprep.subr.mxu0 0.0
    %1177 = vmatpush1.msra.mxu0 %v1146
    %1178 = vmatprep.subr.mxu0 0.0
    %1179 = vmatpush1.msra.mxu0 %v1147
    %1180 = vmatprep.subr.mxu0 0.0
    %1181 = vmatpush1.msra.mxu0 %v1148
    %1182 = vmatprep.subr.mxu0 0.0
    %1183 = vmatpush1.msra.mxu0 %v1149
    %1184 = vmatprep.subr.mxu0 0.0
    %1185 = vmatpush1.msra.mxu0 %v1150
    %1186 = vmatprep.subr.mxu0 0.0
    %1187 = vmatpush1.msra.mxu0 %v1151
    %1188 = vmatprep.subr.mxu0 0.0
    %1189 = vmatpush1.msra.mxu0 %v1152
    %1190 = vmatprep.subr.mxu0 0.0
    %1191 = vmatpush1.msra.mxu0 %v1153
    %1192 = vmatprep.subr.mxu0 0.0
    %1193 = vmatpush1.msra.mxu0 %v1154
    %1194 = vmatprep.subr.mxu0 0.0
    %1195 = vmatpush1.msra.mxu0 0.0
    %1196 = vmatprep.subr.mxu0 0.0
    %1197 = vmatpush1.msra.mxu0 0.0
    %1198 = vmatprep.subr.mxu0 0.0
    %1199 = vmatpush1.msra.mxu0 0.0
    %1200 = vmatprep.subr.mxu0 0.0
    %1201 = vmatpush1.msra.mxu0 0.0
    %1202 = vmatprep.subr.mxu0 0.0
    %1203 = vmatpush1.msra.mxu0 0.0
    %1204 = vmatprep.subr.mxu0 0.0
    %1205 = vmatpush1.msra.mxu0 0.0
    %1206 = vmatprep.subr.mxu0 0.0
    %1207 = vmatpush1.msra.mxu0 0.0
    %1208 = vmatprep.subr.mxu0 0.0
    %1209 = vmatpush1.msra.mxu0 0.0
    %1210 = vmatprep.subr.mxu0 0.0
    %1211 = vmatpush1.msra.mxu0 0.0
    %1212 = vmatprep.subr.mxu0 0.0
    %1213 = vmatpush1.msra.mxu0 0.0
    %1214 = vmatprep.subr.mxu0 0.0
    %1215 = vmatpush1.msra.mxu0 0.0
    %1216 = vmatprep.subr.mxu0 0.0
    %1217 = vmatpush1.msra.mxu0 0.0
    %1218 = vmatprep.subr.mxu0 0.0
    %1219 = vmatpush1.msra.mxu0 0.0
    %1220 = vmatprep.subr.mxu0 0.0
    %1221 = vmatpush1.msra.mxu0 0.0
    %1222 = vmatprep.subr.mxu0 0.0
    %1223 = vmatpush1.msra.mxu0 0.0
    %1224 = vmatprep.subr.mxu0 0.0
    %1225 = vmatpush1.msra.mxu0 0.0
    %1226 = vmatprep.mubr.f32.mxu0 0.0
    %1227 = vmatmul.mubr.f32.gmra.mrb[0].mxu0 %v1138
    %v1228 = vpop.f32.mrb[0].mxu0
    %v1229 = vadd.f32 %v1160, %v1228
    %v1230 = vpop.f32.mrb[0].mxu0
    %1231 = vdwg.mxu0
    %v1232 = vxor.u32 %v1229, 2147483648
    %v1233 = vmul.f32 %v1232, 1.442695
    %v1234 = vpow.pop %v1233
    %v1235 = vadd.f32 %v1234, 1.0
    %v1236 = vrcp.pop %v1235
    %v1237 = vmul.f32 1.0, %v1236
    %v1238 = vmul.f32 %v1229, %v1237
    %v1239 = vld [vmem:[#allocation17] sm:$0xff]
    %v1240 = vld [vmem:[#allocation17 + $0x8] sm:$0xff]
    %v1241 = vld [vmem:[#allocation17 + $0x10] sm:$0xff]
    %v1242 = vld [vmem:[#allocation17 + $0x18] sm:$0xff]
    %v1243 = vld [vmem:[#allocation17 + $0x20] sm:$0xff]
    %v1244 = vld [vmem:[#allocation17 + $0x28] sm:$0xff]
    %v1245 = vld [vmem:[#allocation17 + $0x30] sm:$0xff]
    %v1246 = vld [vmem:[#allocation17 + $0x38] sm:$0xff]
    %v1247 = vld [vmem:[#allocation17 + $0x40] sm:$0xff]
    %v1248 = vld [vmem:[#allocation17 + $0x48] sm:$0xff]
    %v1249 = vld [vmem:[#allocation17 + $0x50] sm:$0xff]
    %v1250 = vld [vmem:[#allocation17 + $0x58] sm:$0xff]
    %v1251 = vld [vmem:[#allocation17 + $0x60] sm:$0xff]
    %v1252 = vld [vmem:[#allocation17 + $0x68] sm:$0xff]
    %v1253 = vld [vmem:[#allocation17 + $0x70] sm:$0xff]
    %v1254 = vld [vmem:[#allocation17 + $0x78] sm:$0xff]
    %v1255 = vld [vmem:[%s39] sm:$0x1]
    %v1257 = vlaneseq
    %v1258 = vshrl.u32 %v1257, 7
    %v1259 = vsub.s32 0, %v1258
    %v1260 = vrot.slane %v1255, %v1259
    %1262 = vmatprep.subr.mxu0 0.0
    %1263 = vmatpush1.msra.mxu0 %v1239
    %1264 = vmatprep.subr.mxu0 0.0
    %1265 = vmatpush1.msra.mxu0 %v1240
    %1266 = vmatprep.subr.mxu0 0.0
    %1267 = vmatpush1.msra.mxu0 %v1241
    %1268 = vmatprep.subr.mxu0 0.0
    %1269 = vmatpush1.msra.mxu0 %v1242
    %1270 = vmatprep.subr.mxu0 0.0
    %1271 = vmatpush1.msra.mxu0 %v1243
    %1272 = vmatprep.subr.mxu0 0.0
    %1273 = vmatpush1.msra.mxu0 %v1244
    %1274 = vmatprep.subr.mxu0 0.0
    %1275 = vmatpush1.msra.mxu0 %v1245
    %1276 = vmatprep.subr.mxu0 0.0
    %1277 = vmatpush1.msra.mxu0 %v1246
    %1278 = vmatprep.subr.mxu0 0.0
    %1279 = vmatpush1.msra.mxu0 %v1247
    %1280 = vmatprep.subr.mxu0 0.0
    %1281 = vmatpush1.msra.mxu0 %v1248
    %1282 = vmatprep.subr.mxu0 0.0
    %1283 = vmatpush1.msra.mxu0 %v1249
    %1284 = vmatprep.subr.mxu0 0.0
    %1285 = vmatpush1.msra.mxu0 %v1250
    %1286 = vmatprep.subr.mxu0 0.0
    %1287 = vmatpush1.msra.mxu0 %v1251
    %1288 = vmatprep.subr.mxu0 0.0
    %1289 = vmatpush1.msra.mxu0 %v1252
    %1290 = vmatprep.subr.mxu0 0.0
    %1291 = vmatpush1.msra.mxu0 %v1253
    %1292 = vmatprep.subr.mxu0 0.0
    %1293 = vmatpush1.msra.mxu0 %v1254
    %1294 = vmatprep.subr.mxu0 0.0
    %1295 = vmatpush1.msra.mxu0 0.0
    %1296 = vmatprep.subr.mxu0 0.0
    %1297 = vmatpush1.msra.mxu0 0.0
    %1298 = vmatprep.subr.mxu0 0.0
    %1299 = vmatpush1.msra.mxu0 0.0
    %1300 = vmatprep.subr.mxu0 0.0
    %1301 = vmatpush1.msra.mxu0 0.0
    %1302 = vmatprep.subr.mxu0 0.0
    %1303 = vmatpush1.msra.mxu0 0.0
    %1304 = vmatprep.subr.mxu0 0.0
    %1305 = vmatpush1.msra.mxu0 0.0
    %1306 = vmatprep.subr.mxu0 0.0
    %1307 = vmatpush1.msra.mxu0 0.0
    %1308 = vmatprep.subr.mxu0 0.0
    %1309 = vmatpush1.msra.mxu0 0.0
    %1310 = vmatprep.subr.mxu0 0.0
    %1311 = vmatpush1.msra.mxu0 0.0
    %1312 = vmatprep.subr.mxu0 0.0
    %1313 = vmatpush1.msra.mxu0 0.0
    %1314 = vmatprep.subr.mxu0 0.0
    %1315 = vmatpush1.msra.mxu0 0.0
    %1316 = vmatprep.subr.mxu0 0.0
    %1317 = vmatpush1.msra.mxu0 0.0
    %1318 = vmatprep.subr.mxu0 0.0
    %1319 = vmatpush1.msra.mxu0 0.0
    %1320 = vmatprep.subr.mxu0 0.0
    %1321 = vmatpush1.msra.mxu0 0.0
    %1322 = vmatprep.subr.mxu0 0.0
    %1323 = vmatpush1.msra.mxu0 0.0
    %1324 = vmatprep.subr.mxu0 0.0
    %1325 = vmatpush1.msra.mxu0 0.0
    %1326 = vmatprep.mubr.f32.mxu0 0.0
    %1327 = vmatmul.mubr.f32.gmra.mrb[0].mxu0 %v1238
    %v1328 = vpop.f32.mrb[0].mxu0
    %v1329 = vadd.f32 %v1260, %v1328
    %v1330 = vpop.f32.mrb[0].mxu0
    %1331 = vdwg.mxu0
    %v1332 = vxor.u32 %v1329, 2147483648
    %v1333 = vmul.f32 %v1332, 1.442695
    %v1334 = vpow.pop %v1333
    %v1335 = vadd.f32 %v1334, 1.0
    %v1336 = vrcp.pop %v1335
    %v1337 = vmul.f32 1.0, %v1336
    %v1338 = vmul.f32 %v1329, %v1337
    %v1339 = vld [vmem:[#allocation19] sm:$0xff]
    %v1340 = vld [vmem:[#allocation19 + $0x8] sm:$0xff]
    %v1341 = vld [vmem:[#allocation19 + $0x10] sm:$0xff]
    %v1342 = vld [vmem:[#allocation19 + $0x18] sm:$0xff]
    %v1343 = vld [vmem:[#allocation19 + $0x20] sm:$0xff]
    %v1344 = vld [vmem:[#allocation19 + $0x28] sm:$0xff]
    %v1345 = vld [vmem:[#allocation19 + $0x30] sm:$0xff]
    %v1346 = vld [vmem:[#allocation19 + $0x38] sm:$0xff]
    %v1347 = vld [vmem:[#allocation19 + $0x40] sm:$0xff]
    %v1348 = vld [vmem:[#allocation19 + $0x48] sm:$0xff]
    %v1349 = vld [vmem:[#allocation19 + $0x50] sm:$0xff]
    %v1350 = vld [vmem:[#allocation19 + $0x58] sm:$0xff]
    %v1351 = vld [vmem:[#allocation19 + $0x60] sm:$0xff]
    %v1352 = vld [vmem:[#allocation19 + $0x68] sm:$0xff]
    %v1353 = vld [vmem:[#allocation19 + $0x70] sm:$0xff]
    %v1354 = vld [vmem:[#allocation19 + $0x78] sm:$0xff]
    %v1355 = vld [vmem:[%s43] sm:$0x1]
    %v1357 = vlaneseq
    %v1358 = vshrl.u32 %v1357, 7
    %v1359 = vsub.s32 0, %v1358
    %v1360 = vrot.slane %v1355, %v1359
    %1362 = vmatprep.subr.mxu0 0.0
    %1363 = vmatpush1.msra.mxu0 %v1339
    %1364 = vmatprep.subr.mxu0 0.0
    %1365 = vmatpush1.msra.mxu0 %v1340
    %1366 = vmatprep.subr.mxu0 0.0
    %1367 = vmatpush1.msra.mxu0 %v1341
    %1368 = vmatprep.subr.mxu0 0.0
    %1369 = vmatpush1.msra.mxu0 %v1342
    %1370 = vmatprep.subr.mxu0 0.0
    %1371 = vmatpush1.msra.mxu0 %v1343
    %1372 = vmatprep.subr.mxu0 0.0
    %1373 = vmatpush1.msra.mxu0 %v1344
    %1374 = vmatprep.subr.mxu0 0.0
    %1375 = vmatpush1.msra.mxu0 %v1345
    %1376 = vmatprep.subr.mxu0 0.0
    %1377 = vmatpush1.msra.mxu0 %v1346
    %1378 = vmatprep.subr.mxu0 0.0
    %1379 = vmatpush1.msra.mxu0 %v1347
    %1380 = vmatprep.subr.mxu0 0.0
    %1381 = vmatpush1.msra.mxu0 %v1348
    %1382 = vmatprep.subr.mxu0 0.0
    %1383 = vmatpush1.msra.mxu0 %v1349
    %1384 = vmatprep.subr.mxu0 0.0
    %1385 = vmatpush1.msra.mxu0 %v1350
    %1386 = vmatprep.subr.mxu0 0.0
    %1387 = vmatpush1.msra.mxu0 %v1351
    %1388 = vmatprep.subr.mxu0 0.0
    %1389 = vmatpush1.msra.mxu0 %v1352
    %1390 = vmatprep.subr.mxu0 0.0
    %1391 = vmatpush1.msra.mxu0 %v1353
    %1392 = vmatprep.subr.mxu0 0.0
    %1393 = vmatpush1.msra.mxu0 %v1354
    %1394 = vmatprep.subr.mxu0 0.0
    %1395 = vmatpush1.msra.mxu0 0.0
    %1396 = vmatprep.subr.mxu0 0.0
    %1397 = vmatpush1.msra.mxu0 0.0
    %1398 = vmatprep.subr.mxu0 0.0
    %1399 = vmatpush1.msra.mxu0 0.0
    %1400 = vmatprep.subr.mxu0 0.0
    %1401 = vmatpush1.msra.mxu0 0.0
    %1402 = vmatprep.subr.mxu0 0.0
    %1403 = vmatpush1.msra.mxu0 0.0
    %1404 = vmatprep.subr.mxu0 0.0
    %1405 = vmatpush1.msra.mxu0 0.0
    %1406 = vmatprep.subr.mxu0 0.0
    %1407 = vmatpush1.msra.mxu0 0.0
    %1408 = vmatprep.subr.mxu0 0.0
    %1409 = vmatpush1.msra.mxu0 0.0
    %1410 = vmatprep.subr.mxu0 0.0
    %1411 = vmatpush1.msra.mxu0 0.0
    %1412 = vmatprep.subr.mxu0 0.0
    %1413 = vmatpush1.msra.mxu0 0.0
    %1414 = vmatprep.subr.mxu0 0.0
    %1415 = vmatpush1.msra.mxu0 0.0
    %1416 = vmatprep.subr.mxu0 0.0
    %1417 = vmatpush1.msra.mxu0 0.0
    %1418 = vmatprep.subr.mxu0 0.0
    %1419 = vmatpush1.msra.mxu0 0.0
    %1420 = vmatprep.subr.mxu0 0.0
    %1421 = vmatpush1.msra.mxu0 0.0
    %1422 = vmatprep.subr.mxu0 0.0
    %1423 = vmatpush1.msra.mxu0 0.0
    %1424 = vmatprep.subr.mxu0 0.0
    %1425 = vmatpush1.msra.mxu0 0.0
    %1426 = vmatprep.mubr.f32.mxu0 0.0
    %1427 = vmatmul.mubr.f32.gmra.mrb[0].mxu0 %v1338
    %v1428 = vpop.f32.mrb[0].mxu0
    %v1429 = vadd.f32 %v1360, %v1428
    %v1430 = vpop.f32.mrb[0].mxu0
    %1431 = vdwg.mxu0
    %v1432 = vxor.u32 %v1429, 2147483648
    %v1433 = vmul.f32 %v1432, 1.442695
    %v1434 = vpow.pop %v1433
    %v1435 = vadd.f32 %v1434, 1.0
    %v1436 = vrcp.pop %v1435
    %v1437 = vmul.f32 1.0, %v1436
    %v1438 = vmul.f32 %v1429, %v1437
    %v1439 = vld [vmem:[#allocation20] sm:$0xff]
    %v1440 = vld [vmem:[#allocation20 + $0x8] sm:$0xff]
    %v1441 = vld [vmem:[#allocation20 + $0x10] sm:$0xff]
    %v1442 = vld [vmem:[#allocation20 + $0x18] sm:$0xff]
    %v1443 = vld [vmem:[#allocation20 + $0x20] sm:$0xff]
    %v1444 = vld [vmem:[#allocation20 + $0x28] sm:$0xff]
    %v1445 = vld [vmem:[#allocation20 + $0x30] sm:$0xff]
    %v1446 = vld [vmem:[#allocation20 + $0x38] sm:$0xff]
    %v1447 = vld [vmem:[#allocation20 + $0x40] sm:$0xff]
    %v1448 = vld [vmem:[#allocation20 + $0x48] sm:$0xff]
    %v1449 = vld [vmem:[#allocation20 + $0x50] sm:$0xff]
    %v1450 = vld [vmem:[#allocation20 + $0x58] sm:$0xff]
    %v1451 = vld [vmem:[#allocation20 + $0x60] sm:$0xff]
    %v1452 = vld [vmem:[#allocation20 + $0x68] sm:$0xff]
    %v1453 = vld [vmem:[#allocation20 + $0x70] sm:$0xff]
    %v1454 = vld [vmem:[#allocation20 + $0x78] sm:$0xff]
    %v1455 = vld [vmem:[#allocation20 + $0x80] sm:$0xff]
    %v1456 = vld [vmem:[#allocation20 + $0x88] sm:$0xff]
    %v1457 = vld [vmem:[#allocation20 + $0x90] sm:$0xff]
    %v1458 = vld [vmem:[#allocation20 + $0x98] sm:$0xff]
    %v1459 = vld [vmem:[#allocation20 + $0xa0] sm:$0xff]
    %v1460 = vld [vmem:[#allocation20 + $0xa8] sm:$0xff]
    %v1461 = vld [vmem:[#allocation20 + $0xb0] sm:$0xff]
    %v1462 = vld [vmem:[#allocation20 + $0xb8] sm:$0xff]
    %v1463 = vld [vmem:[#allocation20 + $0xc0] sm:$0xff]
    %v1464 = vld [vmem:[#allocation20 + $0xc8] sm:$0xff]
    %v1465 = vld [vmem:[#allocation20 + $0xd0] sm:$0xff]
    %v1466 = vld [vmem:[#allocation20 + $0xd8] sm:$0xff]
    %v1467 = vld [vmem:[#allocation20 + $0xe0] sm:$0xff]
    %v1468 = vld [vmem:[#allocation20 + $0xe8] sm:$0xff]
    %v1469 = vld [vmem:[#allocation20 + $0xf0] sm:$0xff]
    %v1470 = vld [vmem:[#allocation20 + $0xf8] sm:$0xff]
    %v1471 = vld [vmem:[#allocation20 + $0x100] sm:$0xff]
    %v1472 = vld [vmem:[#allocation20 + $0x108] sm:$0xff]
    %v1473 = vld [vmem:[#allocation20 + $0x110] sm:$0xff]
    %v1474 = vld [vmem:[#allocation20 + $0x118] sm:$0xff]
    %v1475 = vld [vmem:[#allocation20 + $0x120] sm:$0xff]
    %v1476 = vld [vmem:[#allocation20 + $0x128] sm:$0xff]
    %v1477 = vld [vmem:[#allocation20 + $0x130] sm:$0xff]
    %v1478 = vld [vmem:[#allocation20 + $0x138] sm:$0xff]
    %v1479 = vld [vmem:[#allocation20 + $0x140] sm:$0xff]
    %v1480 = vld [vmem:[#allocation20 + $0x148] sm:$0xff]
    %v1481 = vld [vmem:[#allocation20 + $0x150] sm:$0xff]
    %v1482 = vld [vmem:[#allocation20 + $0x158] sm:$0xff]
    %v1483 = vld [vmem:[#allocation20 + $0x160] sm:$0xff]
    %v1484 = vld [vmem:[#allocation20 + $0x168] sm:$0xff]
    %v1485 = vld [vmem:[#allocation20 + $0x170] sm:$0xff]
    %v1486 = vld [vmem:[#allocation20 + $0x178] sm:$0xff]
    %v1487 = vld [vmem:[#allocation20 + $0x180] sm:$0xff]
    %v1488 = vld [vmem:[#allocation20 + $0x188] sm:$0xff]
    %v1489 = vld [vmem:[#allocation20 + $0x190] sm:$0xff]
    %v1490 = vld [vmem:[#allocation20 + $0x198] sm:$0xff]
    %v1491 = vld [vmem:[#allocation20 + $0x1a0] sm:$0xff]
    %v1492 = vld [vmem:[#allocation20 + $0x1a8] sm:$0xff]
    %v1493 = vld [vmem:[#allocation20 + $0x1b0] sm:$0xff]
    %v1494 = vld [vmem:[#allocation20 + $0x1b8] sm:$0xff]
    %v1495 = vld [vmem:[#allocation20 + $0x1c0] sm:$0xff]
    %v1496 = vld [vmem:[#allocation20 + $0x1c8] sm:$0xff]
    %v1497 = vld [vmem:[#allocation20 + $0x1d0] sm:$0xff]
    %v1498 = vld [vmem:[#allocation20 + $0x1d8] sm:$0xff]
    %v1499 = vld [vmem:[#allocation20 + $0x1e0] sm:$0xff]
    %v1500 = vld [vmem:[#allocation20 + $0x1e8] sm:$0xff]
    %v1501 = vld [vmem:[#allocation20 + $0x1f0] sm:$0xff]
    %v1502 = vld [vmem:[#allocation20 + $0x1f8] sm:$0xff]
    %v1503 = vld [vmem:[#allocation20 + $0x200] sm:$0xff]
    %v1504 = vld [vmem:[#allocation20 + $0x208] sm:$0xff]
    %v1505 = vld [vmem:[#allocation20 + $0x210] sm:$0xff]
    %v1506 = vld [vmem:[#allocation20 + $0x218] sm:$0xff]
    %v1507 = vld [vmem:[#allocation20 + $0x220] sm:$0xff]
    %v1508 = vld [vmem:[#allocation20 + $0x228] sm:$0xff]
    %v1509 = vld [vmem:[#allocation20 + $0x230] sm:$0xff]
    %v1510 = vld [vmem:[#allocation20 + $0x238] sm:$0xff]
    %v1511 = vld [vmem:[#allocation20 + $0x240] sm:$0xff]
    %v1512 = vld [vmem:[#allocation20 + $0x248] sm:$0xff]
    %v1513 = vld [vmem:[#allocation20 + $0x250] sm:$0xff]
    %v1514 = vld [vmem:[#allocation20 + $0x258] sm:$0xff]
    %v1515 = vld [vmem:[#allocation20 + $0x260] sm:$0xff]
    %v1516 = vld [vmem:[#allocation20 + $0x268] sm:$0xff]
    %v1517 = vld [vmem:[#allocation20 + $0x270] sm:$0xff]
    %v1518 = vld [vmem:[#allocation20 + $0x278] sm:$0xff]
    %v1519 = vld [vmem:[#allocation20 + $0x280] sm:$0xff]
    %v1520 = vld [vmem:[#allocation20 + $0x288] sm:$0xff]
    %v1521 = vld [vmem:[#allocation20 + $0x290] sm:$0xff]
    %v1522 = vld [vmem:[#allocation20 + $0x298] sm:$0xff]
    %v1523 = vld [vmem:[#allocation20 + $0x2a0] sm:$0xff]
    %v1524 = vld [vmem:[#allocation20 + $0x2a8] sm:$0xff]
    %v1525 = vld [vmem:[#allocation20 + $0x2b0] sm:$0xff]
    %v1526 = vld [vmem:[#allocation20 + $0x2b8] sm:$0xff]
    %v1527 = vld [vmem:[#allocation20 + $0x2c0] sm:$0xff]
    %v1528 = vld [vmem:[#allocation20 + $0x2c8] sm:$0xff]
    %v1529 = vld [vmem:[#allocation20 + $0x2d0] sm:$0xff]
    %v1530 = vld [vmem:[#allocation20 + $0x2d8] sm:$0xff]
    %v1531 = vld [vmem:[#allocation20 + $0x2e0] sm:$0xff]
    %v1532 = vld [vmem:[#allocation20 + $0x2e8] sm:$0xff]
    %v1533 = vld [vmem:[#allocation20 + $0x2f0] sm:$0xff]
    %v1534 = vld [vmem:[#allocation20 + $0x2f8] sm:$0xff]
    %v1535 = vld [vmem:[%s47] sm:$0x3f]
    %v1537 = vlaneseq
    %v1538 = vshrl.u32 %v1537, 7
    %v1539 = vsub.s32 0, %v1538
    %v1540 = vrot.slane %v1535, %v1539
    %v1541 = vlaneseq
    %v1542 = vshrl.u32 %v1541, 7
    %v1543 = vsub.s32 1, %v1542
    %v1544 = vrot.slane %v1535, %v1543
    %v1545 = vlaneseq
    %v1546 = vshrl.u32 %v1545, 7
    %v1547 = vsub.s32 2, %v1546
    %v1548 = vrot.slane %v1535, %v1547
    %v1549 = vlaneseq
    %v1550 = vshrl.u32 %v1549, 7
    %v1551 = vsub.s32 3, %v1550
    %v1552 = vrot.slane %v1535, %v1551
    %v1553 = vlaneseq
    %v1554 = vshrl.u32 %v1553, 7
    %v1555 = vsub.s32 4, %v1554
    %v1556 = vrot.slane %v1535, %v1555
    %v1557 = vlaneseq
    %v1558 = vshrl.u32 %v1557, 7
    %v1559 = vsub.s32 5, %v1558
    %v1560 = vrot.slane %v1535, %v1559
    %1567 = vmatprep.subr.mxu0 %v1440
    %1568 = vmatpush1.msra.mxu0 %v1439
    %1569 = vmatprep.subr.mxu0 %v1446
    %1570 = vmatpush1.msra.mxu0 %v1445
    %1571 = vmatprep.subr.mxu0 %v1452
    %1572 = vmatpush1.msra.mxu0 %v1451
    %1573 = vmatprep.subr.mxu0 %v1458
    %1574 = vmatpush1.msra.mxu0 %v1457
    %1575 = vmatprep.subr.mxu0 %v1464
    %1576 = vmatpush1.msra.mxu0 %v1463
    %1577 = vmatprep.subr.mxu0 %v1470
    %1578 = vmatpush1.msra.mxu0 %v1469
    %1579 = vmatprep.subr.mxu0 %v1476
    %1580 = vmatpush1.msra.mxu0 %v1475
    %1581 = vmatprep.subr.mxu0 %v1482
    %1582 = vmatpush1.msra.mxu0 %v1481
    %1583 = vmatprep.subr.mxu0 %v1488
    %1584 = vmatpush1.msra.mxu0 %v1487
    %1585 = vmatprep.subr.mxu0 %v1494
    %1586 = vmatpush1.msra.mxu0 %v1493
    %1587 = vmatprep.subr.mxu0 %v1500
    %1588 = vmatpush1.msra.mxu0 %v1499
    %1589 = vmatprep.subr.mxu0 %v1506
    %1590 = vmatpush1.msra.mxu0 %v1505
    %1591 = vmatprep.subr.mxu0 %v1512
    %1592 = vmatpush1.msra.mxu0 %v1511
    %1593 = vmatprep.subr.mxu0 %v1518
    %1594 = vmatpush1.msra.mxu0 %v1517
    %1595 = vmatprep.subr.mxu0 %v1524
    %1596 = vmatpush1.msra.mxu0 %v1523
    %1597 = vmatprep.subr.mxu0 %v1530
    %1598 = vmatpush1.msra.mxu0 %v1529
    %1599 = vmatprep.subr.mxu0 0.0
    %1600 = vmatpush1.msra.mxu0 0.0
    %1601 = vmatprep.subr.mxu0 0.0
    %1602 = vmatpush1.msra.mxu0 0.0
    %1603 = vmatprep.subr.mxu0 0.0
    %1604 = vmatpush1.msra.mxu0 0.0
    %1605 = vmatprep.subr.mxu0 0.0
    %1606 = vmatpush1.msra.mxu0 0.0
    %1607 = vmatprep.subr.mxu0 0.0
    %1608 = vmatpush1.msra.mxu0 0.0
    %1609 = vmatprep.subr.mxu0 0.0
    %1610 = vmatpush1.msra.mxu0 0.0
    %1611 = vmatprep.subr.mxu0 0.0
    %1612 = vmatpush1.msra.mxu0 0.0
    %1613 = vmatprep.subr.mxu0 0.0
    %1614 = vmatpush1.msra.mxu0 0.0
    %1615 = vmatprep.subr.mxu0 0.0
    %1616 = vmatpush1.msra.mxu0 0.0
    %1617 = vmatprep.subr.mxu0 0.0
    %1618 = vmatpush1.msra.mxu0 0.0
    %1619 = vmatprep.subr.mxu0 0.0
    %1620 = vmatpush1.msra.mxu0 0.0
    %1621 = vmatprep.subr.mxu0 0.0
    %1622 = vmatpush1.msra.mxu0 0.0
    %1623 = vmatprep.subr.mxu0 0.0
    %1624 = vmatpush1.msra.mxu0 0.0
    %1625 = vmatprep.subr.mxu0 0.0
    %1626 = vmatpush1.msra.mxu0 0.0
    %1627 = vmatprep.subr.mxu0 0.0
    %1628 = vmatpush1.msra.mxu0 0.0
    %1629 = vmatprep.subr.mxu0 0.0
    %1630 = vmatpush1.msra.mxu0 0.0
    %1631 = vmatprep.mubr.f32.mxu0 0.0
    %1632 = vmatmul.mubr.f32.gmra.mrb[0].mxu0 %v1438
    %v1633 = vpop.f32.mrb[0].mxu0
    %v1634 = vadd.f32 %v1540, %v1633
    %v1635 = vpop.f32.mrb[0].mxu0
    %v1636 = vadd.f32 %v1544, %v1635
    %1637 = vdwg.mxu0
    %1638 = vmatprep.subr.mxu0 %v1442
    %1639 = vmatpush1.msra.mxu0 %v1441
    %1640 = vmatprep.subr.mxu0 %v1448
    %1641 = vmatpush1.msra.mxu0 %v1447
    %1642 = vmatprep.subr.mxu0 %v1454
    %1643 = vmatpush1.msra.mxu0 %v1453
    %1644 = vmatprep.subr.mxu0 %v1460
    %1645 = vmatpush1.msra.mxu0 %v1459
    %1646 = vmatprep.subr.mxu0 %v1466
    %1647 = vmatpush1.msra.mxu0 %v1465
    %1648 = vmatprep.subr.mxu0 %v1472
    %1649 = vmatpush1.msra.mxu0 %v1471
    %1650 = vmatprep.subr.mxu0 %v1478
    %1651 = vmatpush1.msra.mxu0 %v1477
    %1652 = vmatprep.subr.mxu0 %v1484
    %1653 = vmatpush1.msra.mxu0 %v1483
    %1654 = vmatprep.subr.mxu0 %v1490
    %1655 = vmatpush1.msra.mxu0 %v1489
    %1656 = vmatprep.subr.mxu0 %v1496
    %1657 = vmatpush1.msra.mxu0 %v1495
    %1658 = vmatprep.subr.mxu0 %v1502
    %1659 = vmatpush1.msra.mxu0 %v1501
    %1660 = vmatprep.subr.mxu0 %v1508
    %1661 = vmatpush1.msra.mxu0 %v1507
    %1662 = vmatprep.subr.mxu0 %v1514
    %1663 = vmatpush1.msra.mxu0 %v1513
    %1664 = vmatprep.subr.mxu0 %v1520
    %1665 = vmatpush1.msra.mxu0 %v1519
    %1666 = vmatprep.subr.mxu0 %v1526
    %1667 = vmatpush1.msra.mxu0 %v1525
    %1668 = vmatprep.subr.mxu0 %v1532
    %1669 = vmatpush1.msra.mxu0 %v1531
    %1670 = vmatprep.subr.mxu0 0.0
    %1671 = vmatpush1.msra.mxu0 0.0
    %1672 = vmatprep.subr.mxu0 0.0
    %1673 = vmatpush1.msra.mxu0 0.0
    %1674 = vmatprep.subr.mxu0 0.0
    %1675 = vmatpush1.msra.mxu0 0.0
    %1676 = vmatprep.subr.mxu0 0.0
    %1677 = vmatpush1.msra.mxu0 0.0
    %1678 = vmatprep.subr.mxu0 0.0
    %1679 = vmatpush1.msra.mxu0 0.0
    %1680 = vmatprep.subr.mxu0 0.0
    %1681 = vmatpush1.msra.mxu0 0.0
    %1682 = vmatprep.subr.mxu0 0.0
    %1683 = vmatpush1.msra.mxu0 0.0
    %1684 = vmatprep.subr.mxu0 0.0
    %1685 = vmatpush1.msra.mxu0 0.0
    %1686 = vmatprep.subr.mxu0 0.0
    %1687 = vmatpush1.msra.mxu0 0.0
    %1688 = vmatprep.subr.mxu0 0.0
    %1689 = vmatpush1.msra.mxu0 0.0
    %1690 = vmatprep.subr.mxu0 0.0
    %1691 = vmatpush1.msra.mxu0 0.0
    %1692 = vmatprep.subr.mxu0 0.0
    %1693 = vmatpush1.msra.mxu0 0.0
    %1694 = vmatprep.subr.mxu0 0.0
    %1695 = vmatpush1.msra.mxu0 0.0
    %1696 = vmatprep.subr.mxu0 0.0
    %1697 = vmatpush1.msra.mxu0 0.0
    %1698 = vmatprep.subr.mxu0 0.0
    %1699 = vmatpush1.msra.mxu0 0.0
    %1700 = vmatprep.subr.mxu0 0.0
    %1701 = vmatpush1.msra.mxu0 0.0
    %1702 = vmatprep.mubr.f32.mxu0 0.0
    %1703 = vmatmul.mubr.f32.gmra.mrb[0].mxu0 %v1438
    %v1704 = vpop.f32.mrb[0].mxu0
    %v1705 = vadd.f32 %v1548, %v1704
    %v1706 = vpop.f32.mrb[0].mxu0
    %v1707 = vadd.f32 %v1552, %v1706
    %1708 = vdwg.mxu0
    %1709 = vmatprep.subr.mxu0 %v1444
    %1710 = vmatpush1.msra.mxu0 %v1443
    %1711 = vmatprep.subr.mxu0 %v1450
    %1712 = vmatpush1.msra.mxu0 %v1449
    %1713 = vmatprep.subr.mxu0 %v1456
    %1714 = vmatpush1.msra.mxu0 %v1455
    %1715 = vmatprep.subr.mxu0 %v1462
    %1716 = vmatpush1.msra.mxu0 %v1461
    %1717 = vmatprep.subr.mxu0 %v1468
    %1718 = vmatpush1.msra.mxu0 %v1467
    %1719 = vmatprep.subr.mxu0 %v1474
    %1720 = vmatpush1.msra.mxu0 %v1473
    %1721 = vmatprep.subr.mxu0 %v1480
    %1722 = vmatpush1.msra.mxu0 %v1479
    %1723 = vmatprep.subr.mxu0 %v1486
    %1724 = vmatpush1.msra.mxu0 %v1485
    %1725 = vmatprep.subr.mxu0 %v1492
    %1726 = vmatpush1.msra.mxu0 %v1491
    %1727 = vmatprep.subr.mxu0 %v1498
    %1728 = vmatpush1.msra.mxu0 %v1497
    %1729 = vmatprep.subr.mxu0 %v1504
    %1730 = vmatpush1.msra.mxu0 %v1503
    %1731 = vmatprep.subr.mxu0 %v1510
    %1732 = vmatpush1.msra.mxu0 %v1509
    %1733 = vmatprep.subr.mxu0 %v1516
    %1734 = vmatpush1.msra.mxu0 %v1515
    %1735 = vmatprep.subr.mxu0 %v1522
    %1736 = vmatpush1.msra.mxu0 %v1521
    %1737 = vmatprep.subr.mxu0 %v1528
    %1738 = vmatpush1.msra.mxu0 %v1527
    %1739 = vmatprep.subr.mxu0 %v1534
    %1740 = vmatpush1.msra.mxu0 %v1533
    %1741 = vmatprep.subr.mxu0 0.0
    %1742 = vmatpush1.msra.mxu0 0.0
    %1743 = vmatprep.subr.mxu0 0.0
    %1744 = vmatpush1.msra.mxu0 0.0
    %1745 = vmatprep.subr.mxu0 0.0
    %1746 = vmatpush1.msra.mxu0 0.0
    %1747 = vmatprep.subr.mxu0 0.0
    %1748 = vmatpush1.msra.mxu0 0.0
    %1749 = vmatprep.subr.mxu0 0.0
    %1750 = vmatpush1.msra.mxu0 0.0
    %1751 = vmatprep.subr.mxu0 0.0
    %1752 = vmatpush1.msra.mxu0 0.0
    %1753 = vmatprep.subr.mxu0 0.0
    %1754 = vmatpush1.msra.mxu0 0.0
    %1755 = vmatprep.subr.mxu0 0.0
    %1756 = vmatpush1.msra.mxu0 0.0
    %1757 = vmatprep.subr.mxu0 0.0
    %1758 = vmatpush1.msra.mxu0 0.0
    %1759 = vmatprep.subr.mxu0 0.0
    %1760 = vmatpush1.msra.mxu0 0.0
    %1761 = vmatprep.subr.mxu0 0.0
    %1762 = vmatpush1.msra.mxu0 0.0
    %1763 = vmatprep.subr.mxu0 0.0
    %1764 = vmatpush1.msra.mxu0 0.0
    %1765 = vmatprep.subr.mxu0 0.0
    %1766 = vmatpush1.msra.mxu0 0.0
    %1767 = vmatprep.subr.mxu0 0.0
    %1768 = vmatpush1.msra.mxu0 0.0
    %1769 = vmatprep.subr.mxu0 0.0
    %1770 = vmatpush1.msra.mxu0 0.0
    %1771 = vmatprep.subr.mxu0 0.0
    %1772 = vmatpush1.msra.mxu0 0.0
    %1773 = vmatprep.mubr.f32.mxu0 0.0
    %1774 = vmatmul.mubr.f32.gmra.mrb[0].mxu0 %v1438
    %v1775 = vpop.f32.mrb[0].mxu0
    %v1776 = vadd.f32 %v1556, %v1775
    %v1777 = vpop.f32.mrb[0].mxu0
    %v1778 = vadd.f32 %v1560, %v1777
    %1779 = vdwg.mxu0
    %v1780 = vsub.f32 0.0, %v1634
    %v1781 = vsub.f32 0.0, %v1636
    %v1782 = vsub.f32 0.0, %v1705
    %v1783 = vsub.f32 0.0, %v1707
    %v1784 = vsub.f32 0.0, %v1776
    %v1785 = vsub.f32 0.0, %v1778
    %v1786 = vmax.f32 %v1780, 0.0
    %v1787 = vmax.f32 %v1781, 0.0
    %v1788 = vmax.f32 %v1782, 0.0
    %v1789 = vmax.f32 %v1783, 0.0
    %v1790 = vmax.f32 %v1784, 0.0
    %v1791 = vmax.f32 %v1785, 0.0
    %vm1792 = vcmp.ne.f32.partialorder %v1780, %v1780
    %vm1793 = vcmp.ne.f32.partialorder %v1781, %v1781
    %vm1794 = vcmp.ne.f32.partialorder %v1782, %v1782
    %vm1795 = vcmp.ne.f32.partialorder %v1783, %v1783
    %vm1796 = vcmp.ne.f32.partialorder %v1784, %v1784
    %vm1797 = vcmp.ne.f32.partialorder %v1785, %v1785
    %v1798 = vadd.f32 %v1780, 0.0
    %v1799 = vadd.f32 %v1781, 0.0
    %v1800 = vadd.f32 %v1782, 0.0
    %v1801 = vadd.f32 %v1783, 0.0
    %v1802 = vadd.f32 %v1784, 0.0
    %v1803 = vadd.f32 %v1785, 0.0
    %v1804 = vand.u32 2147483647, %v1780
    %v1805 = vand.u32 2147483647, %v1781
    %v1806 = vand.u32 2147483647, %v1782
    %v1807 = vand.u32 2147483647, %v1783
    %v1808 = vand.u32 2147483647, %v1784
    %v1809 = vand.u32 2147483647, %v1785
    %v1810 = vsub.f32 0.0, %v1804
    %v1811 = vsub.f32 0.0, %v1805
    %v1812 = vsub.f32 0.0, %v1806
    %v1813 = vsub.f32 0.0, %v1807
    %v1814 = vsub.f32 0.0, %v1808
    %v1815 = vsub.f32 0.0, %v1809
    %v1816 = vmul.f32 %v1810, 1.442695
    %v1817 = vpow.pop %v1816
    %v1818 = vmul.f32 %v1811, 1.442695
    %v1819 = vpow.pop %v1818
    %v1820 = vmul.f32 %v1812, 1.442695
    %v1821 = vpow.pop %v1820
    %v1822 = vmul.f32 %v1813, 1.442695
    %v1823 = vpow.pop %v1822
    %v1824 = vmul.f32 %v1814, 1.442695
    %v1825 = vpow.pop %v1824
    %v1826 = vmul.f32 %v1815, 1.442695
    %v1827 = vpow.pop %v1826
    %v1828 = vadd.f32 %v1817, 1.0
    %v1829 = vlog2.pop %v1828
    %v1830 = vmul.f32 %v1829, 0.6931472
    %v1831 = vmul.f32 -0.5, %v1817
    %v1832 = vadd.f32 %v1831, 1.0
    %v1833 = vmul.f32 %v1832, %v1817
    %v1834 = vand.u32 2147483647, %v1817
    %vm1835 = vcmp.lt.f32.partialorder %v1834, 0.0004427343
    %v1836 = vsel %vm1835, %v1833, %v1830
    %v1837 = vadd.f32 %v1819, 1.0
    %v1838 = vlog2.pop %v1837
    %v1839 = vmul.f32 %v1838, 0.6931472
    %v1840 = vmul.f32 -0.5, %v1819
    %v1841 = vadd.f32 %v1840, 1.0
    %v1842 = vmul.f32 %v1841, %v1819
    %v1843 = vand.u32 2147483647, %v1819
    %vm1844 = vcmp.lt.f32.partialorder %v1843, 0.0004427343
    %v1845 = vsel %vm1844, %v1842, %v1839
    %v1846 = vadd.f32 %v1821, 1.0
    %v1847 = vlog2.pop %v1846
    %v1848 = vmul.f32 %v1847, 0.6931472
    %v1849 = vmul.f32 -0.5, %v1821
    %v1850 = vadd.f32 %v1849, 1.0
    %v1851 = vmul.f32 %v1850, %v1821
    %v1852 = vand.u32 2147483647, %v1821
    %vm1853 = vcmp.lt.f32.partialorder %v1852, 0.0004427343
    %v1854 = vsel %vm1853, %v1851, %v1848
    %v1855 = vadd.f32 %v1823, 1.0
    %v1856 = vlog2.pop %v1855
    %v1857 = vmul.f32 %v1856, 0.6931472
    %v1858 = vmul.f32 -0.5, %v1823
    %v1859 = vadd.f32 %v1858, 1.0
    %v1860 = vmul.f32 %v1859, %v1823
    %v1861 = vand.u32 2147483647, %v1823
    %vm1862 = vcmp.lt.f32.partialorder %v1861, 0.0004427343
    %v1863 = vsel %vm1862, %v1860, %v1857
    %v1864 = vadd.f32 %v1825, 1.0
    %v1865 = vlog2.pop %v1864
    %v1866 = vmul.f32 %v1865, 0.6931472
    %v1867 = vmul.f32 -0.5, %v1825
    %v1868 = vadd.f32 %v1867, 1.0
    %v1869 = vmul.f32 %v1868, %v1825
    %v1870 = vand.u32 2147483647, %v1825
    %vm1871 = vcmp.lt.f32.partialorder %v1870, 0.0004427343
    %v1872 = vsel %vm1871, %v1869, %v1866
    %v1873 = vadd.f32 %v1827, 1.0
    %v1874 = vlog2.pop %v1873
    %v1875 = vmul.f32 %v1874, 0.6931472
    %v1876 = vmul.f32 -0.5, %v1827
    %v1877 = vadd.f32 %v1876, 1.0
    %v1878 = vmul.f32 %v1877, %v1827
    %v1879 = vand.u32 2147483647, %v1827
    %vm1880 = vcmp.lt.f32.partialorder %v1879, 0.0004427343
    %v1881 = vsel %vm1880, %v1878, %v1875
    %v1882 = vadd.f32 %v1786, %v1836
    %v1883 = vadd.f32 %v1787, %v1845
    %v1884 = vadd.f32 %v1788, %v1854
    %v1885 = vadd.f32 %v1789, %v1863
    %v1886 = vadd.f32 %v1790, %v1872
    %v1887 = vadd.f32 %v1791, %v1881
    %v1888 = vsel %vm1792, %v1798, %v1882
    %v1889 = vsel %vm1793, %v1799, %v1883
    %v1890 = vsel %vm1794, %v1800, %v1884
    %v1891 = vsel %vm1795, %v1801, %v1885
    %v1892 = vsel %vm1796, %v1802, %v1886
    %v1893 = vsel %vm1797, %v1803, %v1887
    %v1894 = vsub.f32 0.0, %v1888
    %v1895 = vsub.f32 0.0, %v1889
    %v1896 = vsub.f32 0.0, %v1890
    %v1897 = vsub.f32 0.0, %v1891
    %v1898 = vsub.f32 0.0, %v1892
    %v1899 = vsub.f32 0.0, %v1893
    %v1900 = vmul.f32 %v1894, 1.442695
    %v1901 = vpow.pop %v1900
    %v1902 = vmul.f32 %v1895, 1.442695
    %v1903 = vpow.pop %v1902
    %v1904 = vmul.f32 %v1896, 1.442695
    %v1905 = vpow.pop %v1904
    %v1906 = vmul.f32 %v1897, 1.442695
    %v1907 = vpow.pop %v1906
    %v1908 = vmul.f32 %v1898, 1.442695
    %v1909 = vpow.pop %v1908
    %v1910 = vmul.f32 %v1899, 1.442695
    %v1911 = vpow.pop %v1910
    %v1912 = vmax.f32 %v1894, -100.0
    %v1913 = vmax.f32 %v1895, -100.0
    %v1914 = vmax.f32 %v1896, -100.0
    %v1915 = vmax.f32 %v1897, -100.0
    %v1916 = vmax.f32 %v1898, -100.0
    %v1917 = vmax.f32 %v1899, -100.0
    %v1918 = vsub.f32 %v1894, %v1634
    %v1919 = vsub.f32 %v1895, %v1636
    %v1920 = vsub.f32 %v1896, %v1705
    %v1921 = vsub.f32 %v1897, %v1707
    %v1922 = vsub.f32 %v1898, %v1776
    %v1923 = vsub.f32 %v1899, %v1778
    %v1924 = vmax.f32 %v1918, -100.0
    %v1925 = vmax.f32 %v1919, -100.0
    %v1926 = vmax.f32 %v1920, -100.0
    %v1927 = vmax.f32 %v1921, -100.0
    %v1928 = vmax.f32 %v1922, -100.0
    %v1929 = vmax.f32 %v1923, -100.0
    %v1930 = vmul.f32 %v276, %v1912
    %v1931 = vmul.f32 %v277, %v1913
    %v1932 = vmul.f32 %v278, %v1914
    %v1933 = vmul.f32 %v279, %v1915
    %v1934 = vmul.f32 %v280, %v1916
    %v1935 = vmul.f32 %v281, %v1917
    %v1936 = vsub.f32 1.0, %v276
    %v1937 = vsub.f32 1.0, %v277
    %v1938 = vsub.f32 1.0, %v278
    %v1939 = vsub.f32 1.0, %v279
    %v1940 = vsub.f32 1.0, %v280
    %v1941 = vsub.f32 1.0, %v281
    %v1942 = vmul.f32 %v1936, %v1924
    %v1943 = vmul.f32 %v1937, %v1925
    %v1944 = vmul.f32 %v1938, %v1926
    %v1945 = vmul.f32 %v1939, %v1927
    %v1946 = vmul.f32 %v1940, %v1928
    %v1947 = vmul.f32 %v1941, %v1929
    %v1948 = vadd.f32 %v1930, %v1942
    %v1949 = vadd.f32 %v1931, %v1943
    %v1950 = vadd.f32 %v1932, %v1944
    %v1951 = vadd.f32 %v1933, %v1945
    %v1952 = vadd.f32 %v1934, %v1946
    %v1953 = vadd.f32 %v1935, %v1947
    %v1954 = vsub.f32 0.0, %v1948
    %v1955 = vsub.f32 0.0, %v1949
    %v1956 = vsub.f32 0.0, %v1950
    %v1957 = vsub.f32 0.0, %v1951
    %v1958 = vsub.f32 0.0, %v1952
    %v1959 = vsub.f32 0.0, %v1953
    %v1960 = vadd.f32 %v1954, %v1955
    %v1961 = vadd.f32 %v1960, %v1956
    %v1962 = vadd.f32 %v1961, %v1957
    %v1963 = vadd.f32 %v1962, %v1958
    %v1964 = vadd.f32 %v1963, %v1959
    %1965 = vadd.xlane.f32.xlu0 %v1964
    %v1966 = vpop.xlane.xlu0 %1965
    %v1967 = vmul.f32 %v1036, %v1036
    %v1968 = vmul.f32 %v1014, %v1014
    %v1969 = vadd.f32 %v1967, %v1968
    %v1970 = vsub.f32 %v1969, 1.0
    %v1971 = vlog2.pop %v1036
    %v1972 = vmul.f32 %v1971, 0.6931472
    %v1973 = vmul.f32 %v1972, 2.0
    %v1974 = vsub.f32 %v1970, %v1973
    %v1975 = vmul.f32 %v1974, 0.5
    %v1976 = vld [vmem:[%s7] sm:$0x1]
    %v1978 = vlaneseq
    %v1979 = vshrl.u32 %v1978, 7
    %v1980 = vsub.s32 0, %v1979
    %v1981 = vrot.slane %v1976, %v1980
    %v1983 = vmul.f32 %v1975, %v1981
    %1984 = vadd.xlane.f32.xlu0 %v1983
    %v1985 = vpop.xlane.xlu0 %1984
    %v1986 = vlaneseq
    %v1987 = vshrl.u32 %v1986, 7
    %s1988 = smul.u32 0, 8
    %v1989 = vstv %s1988
    %v1990 = vadd.s32 %v1987, %v1989
    %vm1991 = vcmp.lt.s32.totalorder %v1990, 2
    %v1992 = vsel %vm1991, 1, 0
    %v1993 = vcvt.s32.f32 %v1992
    %v1994 = vmul.f32 %v1966, %v1993
    %v1995 = vrot.slane %v1994, 4
    %v1996 = vadd.f32 %v1994, %v1995
    %v1997 = vrot.slane %v1996, 2
    %v1998 = vadd.f32 %v1996, %v1997
    %v1999 = vrot.slane %v1998, 1
    %v2000 = vadd.f32 %v1998, %v1999
    %v2001 = vmul.f32 %v1985, %v1993
    %v2002 = vrot.slane %v2001, 4
    %v2003 = vadd.f32 %v2001, %v2002
    %v2004 = vrot.slane %v2003, 2
    %v2005 = vadd.f32 %v2003, %v2004
    %v2006 = vrot.slane %v2005, 1
    %v2007 = vadd.f32 %v2005, %v2006
    %2008 = vst [vmem:[#allocation28] sm:$0xff] %v2000
    %2009 = vst [vmem:[#allocation29] sm:$0xff] %v2007
    %2010 = vst [vmem:[#allocation22] sm:$0xff] %v1014
    %2011 = vst [vmem:[#allocation23] sm:$0xff] %v1036
    %2012 = vst [vmem:[#allocation25] sm:$0xff] %v1038
    %2013 = vst [vmem:[#allocation26] sm:$0xff] %v1901
    %2014 = vst [vmem:[#allocation26 + $0x8] sm:$0xff] %v1903
    %2015 = vst [vmem:[#allocation26 + $0x10] sm:$0xff] %v1905
    %2016 = vst [vmem:[#allocation26 + $0x18] sm:$0xff] %v1907
    %2017 = vst [vmem:[#allocation26 + $0x20] sm:$0xff] %v1909
    %2018 = vst [vmem:[#allocation26 + $0x28] sm:$0xff] %v1911
    // Predicated region
    $region146: #{tpu_custom_call.1} parent=1 // pred_check
      _
    $region147: #{tpu_custom_call.1} parent=1 // pred_check_branch
      %2020 = sbr.rel (0) target = $region149
    $region148: #{tpu_custom_call.1} parent=1 // pred_region
      %s2022 = ssub.s32 128, 128
      %2023 = vsyncadd [#allocation4], %s2022
      %s2025 = sshll.u32 [#allocation22], 4
      %s2026 = int_to_ptr.vmem [resolvable:$true] %s2025
      %2028 = dma.vmem_to_hbm [thread:$0]  %s2026, 128, %s49, [#allocation4]
    $region149: #{tpu_custom_call.1} parent=1 // pred_fallthru
      _
    // Predicated region
    $region150: #{tpu_custom_call.1} parent=1 // pred_check
      _
    $region151: #{tpu_custom_call.1} parent=1 // pred_check_branch
      %2030 = sbr.rel (0) target = $region153
    $region152: #{tpu_custom_call.1} parent=1 // pred_region
      %s2032 = ssub.s32 128, 128
      %2033 = vsyncadd [#allocation24], %s2032
      %s2035 = sshll.u32 [#allocation23], 4
      %s2036 = int_to_ptr.vmem [resolvable:$true] %s2035
      %2038 = dma.vmem_to_hbm [thread:$0]  %s2036, 128, %s51, [#allocation24]
    $region153: #{tpu_custom_call.1} parent=1 // pred_fallthru
      _
    // Predicated region
    $region154: #{tpu_custom_call.1} parent=1 // pred_check
      _
    $region155: #{tpu_custom_call.1} parent=1 // pred_check_branch
      %2040 = sbr.rel (0) target = $region157
    $region156: #{tpu_custom_call.1} parent=1 // pred_region
      %s2042 = ssub.s32 128, 128
      %2043 = vsyncadd [#allocation24], %s2042
      %s2045 = sshll.u32 [#allocation25], 4
      %s2046 = int_to_ptr.vmem [resolvable:$true] %s2045
      %2048 = dma.vmem_to_hbm [thread:$0]  %s2046, 128, %s53, [#allocation24]
    $region157: #{tpu_custom_call.1} parent=1 // pred_fallthru
      _
    // Predicated region
    $region158: #{tpu_custom_call.1} parent=1 // pred_check
      _
    $region159: #{tpu_custom_call.1} parent=1 // pred_check_branch
      %2050 = sbr.rel (0) target = $region161
    $region160: #{tpu_custom_call.1} parent=1 // pred_region
      %s2052 = ssub.s32 768, 768
      %2053 = vsyncadd [#allocation27], %s2052
      %s2055 = sshll.u32 [#allocation26], 4
      %s2056 = int_to_ptr.vmem [resolvable:$true] %s2055
      %2058 = dma.vmem_to_hbm [thread:$0]  %s2056, 768, %s55, [#allocation27]
    $region161: #{tpu_custom_call.1} parent=1 // pred_fallthru
      _
    // Predicated region
    $region162: #{tpu_custom_call.1} parent=1 // pred_check
      _
    $region163: #{tpu_custom_call.1} parent=1 // pred_check_branch
      %2060 = sbr.rel (0) target = $region165
    $region164: #{tpu_custom_call.1} parent=1 // pred_region
      %s2062 = ssub.s32 128, 128
      %2063 = vsyncadd [#allocation27], %s2062
      %s2065 = sshll.u32 [#allocation28], 4
      %s2066 = int_to_ptr.vmem [resolvable:$true] %s2065
      %2068 = dma.vmem_to_hbm [thread:$0]  %s2066, 128, %s57, [#allocation27]
    $region165: #{tpu_custom_call.1} parent=1 // pred_fallthru
      _
    // Predicated region
    $region166: #{tpu_custom_call.1} parent=1 // pred_check
      _
    $region167: #{tpu_custom_call.1} parent=1 // pred_check_branch
      %2070 = sbr.rel (0) target = $region169
    $region168: #{tpu_custom_call.1} parent=1 // pred_region
      %s2072 = ssub.s32 128, 128
      %2073 = vsyncadd [#allocation30], %s2072
      %s2075 = sshll.u32 [#allocation29], 4
      %s2076 = int_to_ptr.vmem [resolvable:$true] %s2075
      %2078 = dma.vmem_to_hbm [thread:$0]  %s2076, 128, %s59, [#allocation30]
    $region169: #{tpu_custom_call.1} parent=1 // pred_fallthru
      _
    // Predicated region
    $region170: #{tpu_custom_call.1} parent=1 // pred_check
      _
    $region171: #{tpu_custom_call.1} parent=1 // pred_check_branch
      %2080 = sbr.rel (0) target = $region173
    $region172: #{tpu_custom_call.1} parent=1 // pred_region
      %2081 = dma.done [#allocation4], 128
    $region173: #{tpu_custom_call.1} parent=1 // pred_fallthru
      _
    // Predicated region
    $region174: #{tpu_custom_call.1} parent=1 // pred_check
      _
    $region175: #{tpu_custom_call.1} parent=1 // pred_check_branch
      %2083 = sbr.rel (0) target = $region177
    $region176: #{tpu_custom_call.1} parent=1 // pred_region
      %2084 = dma.done [#allocation24], 128
    $region177: #{tpu_custom_call.1} parent=1 // pred_fallthru
      _
    // Predicated region
    $region178: #{tpu_custom_call.1} parent=1 // pred_check
      _
    $region179: #{tpu_custom_call.1} parent=1 // pred_check_branch
      %2086 = sbr.rel (0) target = $region181
    $region180: #{tpu_custom_call.1} parent=1 // pred_region
      %2087 = dma.done [#allocation24], 128
    $region181: #{tpu_custom_call.1} parent=1 // pred_fallthru
      _
    // Predicated region
    $region182: #{tpu_custom_call.1} parent=1 // pred_check
      _
    $region183: #{tpu_custom_call.1} parent=1 // pred_check_branch
      %2089 = sbr.rel (0) target = $region185
    $region184: #{tpu_custom_call.1} parent=1 // pred_region
      %2090 = dma.done [#allocation27], 768
    $region185: #{tpu_custom_call.1} parent=1 // pred_fallthru
      _
    // Predicated region
    $region186: #{tpu_custom_call.1} parent=1 // pred_check
      _
    $region187: #{tpu_custom_call.1} parent=1 // pred_check_branch
      %2092 = sbr.rel (0) target = $region189
    $region188: #{tpu_custom_call.1} parent=1 // pred_region
      %2093 = dma.done [#allocation27], 128
    $region189: #{tpu_custom_call.1} parent=1 // pred_fallthru
      _
    // Predicated region
    $region190: #{tpu_custom_call.1} parent=1 // pred_check
      _
    $region191: #{tpu_custom_call.1} parent=1 // pred_check_branch
      %2095 = sbr.rel (0) target = $region193
    $region192: #{tpu_custom_call.1} parent=1 // pred_region
      %2096 = dma.done [#allocation30], 128
    $region193: #{tpu_custom_call.1} parent=1 // pred_fallthru
      _
    %2097 = vsyncpa [#allocation3], 1
    %2098 = vsyncpa [#allocation6], 1
    %2099 = vsyncpa [#allocation9], 1
    %2100 = vsyncpa [#allocation12], 1
    %2101 = vsyncpa [#allocation15], 1
    %2102 = vsyncpa [#allocation18], 1
    %2103 = vsyncpa [#allocation21], 1
    %2104 = vsyncpa [#allocation4], 1
    %2105 = vsyncpa [#allocation24], 1
    %2106 = vsyncpa [#allocation27], 1
    %2107 = vsyncpa [#allocation30], 1

</llo_original>
